<compile_context>
chip_gen: v6e
topology: v6e:2x2x1
jax: 0.10.0
libtpu: 0.0.40
codegen_flags: <defaults>
</compile_context>

<pallas_src>
import functools

import jax
import jax.numpy as jnp
from jax.experimental import pallas as pl
from jax.experimental.pallas import tpu as pltpu

_BN_EPS = 1e-5


# --------------------------------------------------------------- kernel ----

def _double_conv_kernel(x_ref, band1_ref, band2_ref,
                        g1_ref, beta1_ref, g2_ref, beta2_ref,
                        o_ref, *, height):
    """Fused Conv3x3 -> BN -> ReLU -> Conv3x3 -> BN -> ReLU (one invocation).

    Layouts (whole arrays resident in VMEM):
      x_ref     : (M, W*Cin)          f32, M = N*H, column index = w*Cin + ci
      band1_ref : (3, W*Cin,  W*Cout) bf16, banded conv1 weights per kernel row
      band2_ref : (3, W*Cout, W*Cout) bf16, banded conv2 weights per kernel row
      g*_ref / beta*_ref : (1, Cout)  f32, BatchNorm affine parameters
      o_ref     : (M, W*Cout)         f32 output
    """
    m = x_ref.shape[0]
    cout = g1_ref.shape[1]
    wcout = band1_ref.shape[2]
    width = wcout // cout
    inv_cnt = 1.0 / float(m * width)              # 1 / (N*H*W)

    # Row-validity masks for the vertical taps (zero padding along H).
    # Hoisted once; shared by both convs.
    row = jax.lax.broadcasted_iota(jnp.int32, (m, 1), 0)
    hh = row % height
    up_ok = hh >= 1                 # kh = 0 (dh = -1): row-1 inside the image
    dn_ok = hh <= height - 2        # kh = 2 (dh = +1): row+1 inside the image

    # 0/1 channel selectors, built in-kernel (no HBM input / DMA):
    #   sel  [w*C + c, c'] = (c == c')   folds the W lane copies of a channel
    #   sel_t[c', w*C + c] = (c == c')   broadcasts a per-channel row to lanes
    k_i = jax.lax.broadcasted_iota(jnp.int32, (wcout, cout), 0)
    c_i = jax.lax.broadcasted_iota(jnp.int32, (wcout, cout), 1)
    sel = (k_i % cout == c_i).astype(jnp.float32)                 # (W*C, C)
    kt_i = jax.lax.broadcasted_iota(jnp.int32, (cout, wcout), 1)
    ct_i = jax.lax.broadcasted_iota(jnp.int32, (cout, wcout), 0)
    sel_t = (kt_i % cout == ct_i).astype(jnp.float32)             # (C, W*C)

    def conv3x3(act_f32, band_ref):
        """3x3 conv: vertical taps = sublane roll + boundary mask, horizontal
        taps + W-padding folded into the banded weights (one matmul per kh)."""
        wco = band_ref.shape[2]
        acc = jnp.zeros((m, wco), jnp.float32)
        for kh, dh, mask in ((0, -1, up_ok), (1, 0, None), (2, 1, dn_ok)):
            if dh == 0:
                tap = act_f32
            else:
                rolled = pltpu.roll(act_f32, shift=(-dh) % m, axis=0)
                tap = jnp.where(mask, rolled, 0.0)
            acc = acc + jnp.dot(tap.astype(jnp.bfloat16), band_ref[kh],
                                preferred_element_type=jnp.float32)
        return acc

    def bn_relu(y, g_ref, beta_ref):
        """Training-mode BatchNorm (batch stats, biased var) fused with ReLU."""
        # Reduce over rows first (XLU), then fold W lane copies per channel
        # with a tiny matmul -- y is never re-read from HBM.
        s1 = jnp.dot(jnp.sum(y, axis=0, keepdims=True), sel,
                     preferred_element_type=jnp.float32)          # (1, C)
        s2 = jnp.dot(jnp.sum(y * y, axis=0, keepdims=True), sel,
                     preferred_element_type=jnp.float32)          # (1, C)
        mean = s1 * inv_cnt
        # TODO(synk): E[x^2]-E[x]^2 in f32 (clamped); use a shifted / two-pass
        # variance in the future gridded variant for very large H*W.
        var = jnp.maximum(s2 * inv_cnt - mean * mean, 0.0)
        scale = g_ref[...] * jax.lax.rsqrt(var + _BN_EPS)          # (1, C)
        shift = beta_ref[...] - mean * scale
        # Broadcast per-channel scale/shift onto the (w, c)-interleaved lanes
        # ((1,C)x(C,W*C): ~W*C*C MACs, negligible).
        scale_f = jnp.dot(scale, sel_t, preferred_element_type=jnp.float32)
        shift_f = jnp.dot(shift, sel_t, preferred_element_type=jnp.float32)
        return jnp.maximum(y * scale_f + shift_f, 0.0)

    y1 = conv3x3(x_ref[...], band1_ref)
    a1 = bn_relu(y1, g1_ref, beta1_ref)
    y2 = conv3x3(a1, band2_ref)
    o_ref[...] = bn_relu(y2, g2_ref, beta2_ref)


# -------------------------------------------- host-side constant builders ----

def _band_weights(w, width):
    """PyTorch (Cout, Cin, 3, 3) conv weight -> (3, W*Cin, W*Cout) banded mats.

    band[kh, wi*Cin+ci, wo*Cout+co] = w[co, ci, kh, wi-wo+1] when |wi-wo| <= 1,
    else 0, i.e. horizontal taps and zero padding along W are folded into the
    band so a whole image row convolves with one matmul.
    """
    cout, cin = w.shape[0], w.shape[1]
    wt = jnp.transpose(w, (2, 3, 1, 0))                      # (kh, kw, ci, co)
    wi = jnp.arange(width)[:, None]
    wo = jnp.arange(width)[None, :]
    kw = wi - wo + 1                                         # (W, W)
    valid = ((kw >= 0) & (kw <= 2)).astype(w.dtype)
    kw_c = jnp.clip(kw, 0, 2)
    band = wt[:, kw_c] * valid[None, :, :, None, None]       # (3, W, W, Cin, Cout)
    band = jnp.transpose(band, (0, 1, 3, 2, 4))              # (3, W, Cin, W, Cout)
    return band.reshape(3, width * cin, width * cout).astype(jnp.bfloat16)


def _vmem_bytes_estimate(n, h, w, cin, cout):
    """Rough VMEM footprint of the single-block kernel (with DMA headroom)."""
    m = n * h
    wci, wco = w * cin, w * cout
    f32, bf16 = 4, 2
    io = (m * wci * f32              # x block
          + 3 * wci * wco * bf16     # band1
          + 3 * wco * wco * bf16     # band2
          + m * wco * f32)           # output block
    live = (3 * m * wco * f32                       # y1 / a1 / y2 f32 values
            + m * max(wci, wco) * (f32 + bf16)      # rolled tap + bf16 cast
            + 2 * wco * cout * f32                  # in-kernel selectors
            + 4 * cout * f32)                       # BN params
    return 2 * io + live             # 2x: double-buffered in/out DMA slots


# ------------------------------------------------------------ entry point ----

def double_conv_forward(params, x_nchw):
    """DoubleConv forward on NCHW input via one fused Pallas TPU kernel."""
    n, cin, height, width = x_nchw.shape
    cout = params["w1"].shape[0]
    m = n * height
    wci, wco = width * cin, width * cout

    try:
        vmem_cap = int(pltpu.get_tpu_info().vmem_capacity_bytes)
    except Exception:
        vmem_cap = 64 * 1024 * 1024      # conservative: v7x per-TensorCore VMEM

    need = _vmem_bytes_estimate(n, height, width, cin, cout)
    if need > int(0.75 * vmem_cap):
        # TODO(synk): gridded multi-pass variant (HBM intermediates + two-pass
        # BN statistics) for shapes exceeding the single-VMEM-block budget.
        raise NotImplementedError(
            f"DoubleConv single-block kernel needs ~{need} B VMEM "
            f"(> 75% of {vmem_cap} B on this TPU generation)")

    x2 = (jnp.transpose(x_nchw, (0, 2, 3, 1))        # NCHW -> NHWC
          .reshape(m, wci)                           # (N*H, W*Cin)
          .astype(jnp.float32))
    band1 = _band_weights(params["w1"], width)       # (3, W*Cin,  W*Cout) bf16
    band2 = _band_weights(params["w2"], width)       # (3, W*Cout, W*Cout) bf16
    g1 = params["g1"].reshape(1, cout).astype(jnp.float32)
    be1 = params["b1"].reshape(1, cout).astype(jnp.float32)
    g2 = params["g2"].reshape(1, cout).astype(jnp.float32)
    be2 = params["b2"].reshape(1, cout).astype(jnp.float32)

    # Scheduler hint: MXU MACs of the banded conv matmuls + I/O bytes.
    macs = m * 3 * wci * wco + m * 3 * wco * wco
    cost = pl.CostEstimate(
        flops=2 * macs,
        transcendentals=2 * cout,                    # rsqrt per BN channel
        bytes_accessed=(m * wci * 4 + 3 * wci * wco * 2 + 3 * wco * wco * 2
                        + 4 * cout * 4 + m * wco * 4))

    vmem = pl.BlockSpec(memory_space=pltpu.MemorySpace.VMEM)
    out2 = pl.pallas_call(
        functools.partial(_double_conv_kernel, height=height),
        out_shape=jax.ShapeDtypeStruct((m, wco), jnp.float32),
        in_specs=[vmem] * 7,
        out_specs=vmem,
        compiler_params=pltpu.CompilerParams(
            vmem_limit_bytes=int(min(vmem_cap,
                                     max(2 * need + (16 << 20), 32 << 20)))),
        cost_estimate=cost,
    )(x2, band1, band2, g1, be1, g2, be2)

    return jnp.transpose(out2.reshape(n, height, width, cout), (0, 3, 1, 2))


# ---------------------------------------------------- reference & params ----

def double_conv_reference(params, x_nchw):
    """Pure-JAX reference (same bf16 conv operands, f32 accumulation)."""
    def conv(x, wgt):
        return jax.lax.conv_general_dilated(
            x.astype(jnp.bfloat16), wgt.astype(jnp.bfloat16),
            window_strides=(1, 1), padding=((1, 1), (1, 1)),
            dimension_numbers=("NCHW", "OIHW", "NCHW"),
            preferred_element_type=jnp.float32)

    def bn_relu(y, g, b):
        mean = jnp.mean(y, axis=(0, 2, 3), keepdims=True)
        var = jnp.mean(jnp.square(y - mean), axis=(0, 2, 3), keepdims=True)
        yhat = (y - mean) * jax.lax.rsqrt(var + _BN_EPS)
        return jnp.maximum(
            yhat * g.reshape(1, -1, 1, 1) + b.reshape(1, -1, 1, 1), 0.0)

    y = bn_relu(conv(x_nchw, params["w1"]), params["g1"], params["b1"])
    return bn_relu(conv(y, params["w2"]), params["g2"], params["b2"])


def init_double_conv_params(key, in_ch, out_ch):
    k1, k2, k3, k4, k5, k6 = jax.random.split(key, 6)
    w1 = jax.random.normal(k1, (out_ch, in_ch, 3, 3), jnp.float32) / jnp.sqrt(9 * in_ch)
    w2 = jax.random.normal(k2, (out_ch, out_ch, 3, 3), jnp.float32) / jnp.sqrt(9 * out_ch)
    return {
        "w1": w1,
        "g1": 1.0 + 0.1 * jax.random.normal(k3, (out_ch,), jnp.float32),
        "b1": 0.1 * jax.random.normal(k4, (out_ch,), jnp.float32),
        "w2": w2,
        "g2": 1.0 + 0.1 * jax.random.normal(k5, (out_ch,), jnp.float32),
        "b2": 0.1 * jax.random.normal(k6, (out_ch,), jnp.float32),
    }


if __name__ == "__main__":
    key = jax.random.PRNGKey(0)
    kx, kp = jax.random.split(key)

    n, cin, height, width = 2, 4, 16, 16
    cout = 8
    x = jax.random.normal(kx, (n, cin, height, width), jnp.float32)
    params = init_double_conv_params(kp, cin, cout)

    fwd = jax.jit(double_conv_forward)
    out = jax.block_until_ready(fwd(params, x))

    assert out.shape == (n, cout, height, width), out.shape
    assert bool(jnp.all(jnp.isfinite(out)))

    ref = jax.block_until_ready(double_conv_reference(params, x))
    max_err = float(jnp.max(jnp.abs(out - ref)))
    assert max_err < 7.5e-2, f"max abs error vs reference: {max_err}"

    print("KERNEL_OK")
</pallas_src>

<mosaic_0001>
module attributes {stable_mosaic.version = 11 : i64} {
  func.func @_double_conv_kernel(%arg0: memref<32x64xf32, #tpu.memory_space<vmem>>, %arg1: memref<3x64x128xbf16, #tpu.memory_space<vmem>>, %arg2: memref<3x128x128xbf16, #tpu.memory_space<vmem>>, %arg3: memref<1x8xf32, #tpu.memory_space<vmem>>, %arg4: memref<1x8xf32, #tpu.memory_space<vmem>>, %arg5: memref<1x8xf32, #tpu.memory_space<vmem>>, %arg6: memref<1x8xf32, #tpu.memory_space<vmem>>, %arg7: memref<32x128xf32, #tpu.memory_space<vmem>>) attributes {dimension_semantics = [], scalar_prefetch = 0 : i64, scratch_operands = 0 : i64, tpu.core_type = #tpu.core_type<tc>} {
    %0 = tpu.iota {dimensions = array<i32: 0>} : vector<32x1xi32>
    %c16_i32 = arith.constant 16 : i32
    %c0_i32 = arith.constant 0 : i32
    %1 = arith.cmpi eq, %c16_i32, %c0_i32 : i32
    %c1_i32 = arith.constant 1 : i32
    %2 = arith.select %1, %c1_i32, %c16_i32 : i32
    %3 = vector.broadcast %2 : i32 to vector<32x1xi32>
    %4 = arith.remsi %0, %3 : vector<32x1xi32>
    %c0_i32_0 = arith.constant 0 : i32
    %5 = vector.broadcast %c0_i32_0 : i32 to vector<32x1xi32>
    %6 = arith.cmpi ne, %4, %5 : vector<32x1xi32>
    %c0_i32_1 = arith.constant 0 : i32
    %7 = vector.broadcast %c0_i32_1 : i32 to vector<32x1xi32>
    %8 = arith.cmpi slt, %4, %7 : vector<32x1xi32>
    %c0_i32_2 = arith.constant 0 : i32
    %9 = arith.cmpi slt, %2, %c0_i32_2 : i32
    %10 = vector.broadcast %9 : i1 to vector<32x1xi1>
    %11 = vector.broadcast %10 : vector<32x1xi1> to vector<32x1xi1>
    %12 = arith.xori %8, %11 : vector<32x1xi1>
    %13 = arith.andi %12, %6 : vector<32x1xi1>
    %14 = vector.broadcast %2 : i32 to vector<32x1xi32>
    %15 = arith.addi %4, %14 : vector<32x1xi32>
    %16 = arith.select %13, %15, %4 : vector<32x1xi1>, vector<32x1xi32>
    %c1_i32_3 = arith.constant 1 : i32
    %17 = vector.broadcast %c1_i32_3 : i32 to vector<32x1xi32>
    %18 = arith.cmpi sge, %16, %17 : vector<32x1xi32>
    %c14_i32 = arith.constant 14 : i32
    %19 = vector.broadcast %c14_i32 : i32 to vector<32x1xi32>
    %20 = arith.cmpi sle, %16, %19 : vector<32x1xi32>
    %21 = tpu.iota {dimensions = array<i32: 0>} : vector<128x8xi32>
    %22 = tpu.iota {dimensions = array<i32: 1>} : vector<128x8xi32>
    %c8_i32 = arith.constant 8 : i32
    %c0_i32_4 = arith.constant 0 : i32
    %23 = arith.cmpi eq, %c8_i32, %c0_i32_4 : i32
    %c1_i32_5 = arith.constant 1 : i32
    %24 = arith.select %23, %c1_i32_5, %c8_i32 : i32
    %25 = vector.broadcast %24 : i32 to vector<128x8xi32>
    %26 = arith.remsi %21, %25 : vector<128x8xi32>
    %c0_i32_6 = arith.constant 0 : i32
    %27 = vector.broadcast %c0_i32_6 : i32 to vector<128x8xi32>
    %28 = arith.cmpi ne, %26, %27 : vector<128x8xi32>
    %c0_i32_7 = arith.constant 0 : i32
    %29 = vector.broadcast %c0_i32_7 : i32 to vector<128x8xi32>
    %30 = arith.cmpi slt, %26, %29 : vector<128x8xi32>
    %c0_i32_8 = arith.constant 0 : i32
    %31 = arith.cmpi slt, %24, %c0_i32_8 : i32
    %32 = vector.broadcast %31 : i1 to vector<128x8xi1>
    %33 = vector.broadcast %32 : vector<128x8xi1> to vector<128x8xi1>
    %34 = arith.xori %30, %33 : vector<128x8xi1>
    %35 = arith.andi %34, %28 : vector<128x8xi1>
    %36 = vector.broadcast %24 : i32 to vector<128x8xi32>
    %37 = arith.addi %26, %36 : vector<128x8xi32>
    %38 = arith.select %35, %37, %26 : vector<128x8xi1>, vector<128x8xi32>
    %39 = arith.cmpi eq, %38, %22 : vector<128x8xi32>
    %40 = arith.extui %39 : vector<128x8xi1> to vector<128x8xi32>
    %41 = arith.sitofp %40 : vector<128x8xi32> to vector<128x8xf32>
    %42 = tpu.iota {dimensions = array<i32: 1>} : vector<8x128xi32>
    %43 = tpu.iota {dimensions = array<i32: 0>} : vector<8x128xi32>
    %c8_i32_9 = arith.constant 8 : i32
    %c0_i32_10 = arith.constant 0 : i32
    %44 = arith.cmpi eq, %c8_i32_9, %c0_i32_10 : i32
    %c1_i32_11 = arith.constant 1 : i32
    %45 = arith.select %44, %c1_i32_11, %c8_i32_9 : i32
    %46 = vector.broadcast %45 : i32 to vector<8x128xi32>
    %47 = arith.remsi %42, %46 : vector<8x128xi32>
    %c0_i32_12 = arith.constant 0 : i32
    %48 = vector.broadcast %c0_i32_12 : i32 to vector<8x128xi32>
    %49 = arith.cmpi ne, %47, %48 : vector<8x128xi32>
    %c0_i32_13 = arith.constant 0 : i32
    %50 = vector.broadcast %c0_i32_13 : i32 to vector<8x128xi32>
    %51 = arith.cmpi slt, %47, %50 : vector<8x128xi32>
    %c0_i32_14 = arith.constant 0 : i32
    %52 = arith.cmpi slt, %45, %c0_i32_14 : i32
    %53 = vector.broadcast %52 : i1 to vector<8x128xi1>
    %54 = vector.broadcast %53 : vector<8x128xi1> to vector<8x128xi1>
    %55 = arith.xori %51, %54 : vector<8x128xi1>
    %56 = arith.andi %55, %49 : vector<8x128xi1>
    %57 = vector.broadcast %45 : i32 to vector<8x128xi32>
    %58 = arith.addi %47, %57 : vector<8x128xi32>
    %59 = arith.select %56, %58, %47 : vector<8x128xi1>, vector<8x128xi32>
    %60 = arith.cmpi eq, %59, %43 : vector<8x128xi32>
    %61 = arith.extui %60 : vector<8x128xi1> to vector<8x128xi32>
    %62 = arith.sitofp %61 : vector<8x128xi32> to vector<8x128xf32>
    %c0 = arith.constant 0 : index
    %c0_15 = arith.constant 0 : index
    %63 = vector.load %arg0[%c0, %c0_15] : memref<32x64xf32, #tpu.memory_space<vmem>>, vector<32x64xf32>
    %cst = arith.constant 0.000000e+00 : f32
    %64 = vector.broadcast %cst : f32 to vector<32x128xf32>
    %c1_i32_16 = arith.constant 1 : i32
    %65 = tpu.dynamic_rotate %63 by %c1_i32_16 dim 0 : vector<32x64xf32>, i32 -> vector<32x64xf32>
    %cst_17 = arith.constant 0.000000e+00 : f32
    %66 = vector.shape_cast %18 : vector<32x1xi1> to vector<32x1xi1>
    %67 = vector.broadcast %66 : vector<32x1xi1> to vector<32x64xi1>
    %68 = vector.broadcast %cst_17 : f32 to vector<32x64xf32>
    %69 = arith.select %67, %65, %68 : vector<32x64xi1>, vector<32x64xf32>
    %70 = arith.truncf %69 : vector<32x64xf32> to vector<32x64xbf16>
    %c0_18 = arith.constant 0 : index
    %c0_19 = arith.constant 0 : index
    %c0_20 = arith.constant 0 : index
    %71 = vector.load %arg1[%c0_18, %c0_19, %c0_20] : memref<3x64x128xbf16, #tpu.memory_space<vmem>>, vector<1x64x128xbf16>
    %72 = vector.shape_cast %71 : vector<1x64x128xbf16> to vector<64x128xbf16>
    %cst_21 = arith.constant dense<0.000000e+00> : vector<32x128xf32>
    %73 = tpu.matmul %70, %72, %cst_21 {dimension_numbers = #tpu.dot_dimension_numbers<[1], [0], [0], [1], [0, 0, 1, 1], [], []>} : vector<32x64xbf16>, vector<64x128xbf16>, vector<32x128xf32> -> vector<32x128xf32>
    %74 = arith.addf %64, %73 : vector<32x128xf32>
    %75 = arith.truncf %63 : vector<32x64xf32> to vector<32x64xbf16>
    %c1 = arith.constant 1 : index
    %c0_22 = arith.constant 0 : index
    %c0_23 = arith.constant 0 : index
    %76 = vector.load %arg1[%c1, %c0_22, %c0_23] : memref<3x64x128xbf16, #tpu.memory_space<vmem>>, vector<1x64x128xbf16>
    %77 = vector.shape_cast %76 : vector<1x64x128xbf16> to vector<64x128xbf16>
    %cst_24 = arith.constant dense<0.000000e+00> : vector<32x128xf32>
    %78 = tpu.matmul %75, %77, %cst_24 {dimension_numbers = #tpu.dot_dimension_numbers<[1], [0], [0], [1], [0, 0, 1, 1], [], []>} : vector<32x64xbf16>, vector<64x128xbf16>, vector<32x128xf32> -> vector<32x128xf32>
    %79 = arith.addf %74, %78 : vector<32x128xf32>
    %c31_i32 = arith.constant 31 : i32
    %80 = tpu.dynamic_rotate %63 by %c31_i32 dim 0 : vector<32x64xf32>, i32 -> vector<32x64xf32>
    %cst_25 = arith.constant 0.000000e+00 : f32
    %81 = vector.shape_cast %20 : vector<32x1xi1> to vector<32x1xi1>
    %82 = vector.broadcast %81 : vector<32x1xi1> to vector<32x64xi1>
    %83 = vector.broadcast %cst_25 : f32 to vector<32x64xf32>
    %84 = arith.select %82, %80, %83 : vector<32x64xi1>, vector<32x64xf32>
    %85 = arith.truncf %84 : vector<32x64xf32> to vector<32x64xbf16>
    %c2 = arith.constant 2 : index
    %c0_26 = arith.constant 0 : index
    %c0_27 = arith.constant 0 : index
    %86 = vector.load %arg1[%c2, %c0_26, %c0_27] : memref<3x64x128xbf16, #tpu.memory_space<vmem>>, vector<1x64x128xbf16>
    %87 = vector.shape_cast %86 : vector<1x64x128xbf16> to vector<64x128xbf16>
    %cst_28 = arith.constant dense<0.000000e+00> : vector<32x128xf32>
    %88 = tpu.matmul %85, %87, %cst_28 {dimension_numbers = #tpu.dot_dimension_numbers<[1], [0], [0], [1], [0, 0, 1, 1], [], []>} : vector<32x64xbf16>, vector<64x128xbf16>, vector<32x128xf32> -> vector<32x128xf32>
    %89 = arith.addf %79, %88 : vector<32x128xf32>
    %cst_29 = arith.constant dense<0.000000e+00> : vector<128xf32>
    %90 = vector.multi_reduction <add>, %89, %cst_29 [0] : vector<32x128xf32> to vector<128xf32>
    %91 = vector.shape_cast %90 : vector<128xf32> to vector<1x128xf32>
    %cst_30 = arith.constant dense<0.000000e+00> : vector<1x8xf32>
    %92 = tpu.matmul %91, %41, %cst_30 {dimension_numbers = #tpu.dot_dimension_numbers<[1], [0], [0], [1], [0, 0, 1, 1], [], []>} : vector<1x128xf32>, vector<128x8xf32>, vector<1x8xf32> -> vector<1x8xf32>
    %93 = arith.mulf %89, %89 : vector<32x128xf32>
    %cst_31 = arith.constant dense<0.000000e+00> : vector<128xf32>
    %94 = vector.multi_reduction <add>, %93, %cst_31 [0] : vector<32x128xf32> to vector<128xf32>
    %95 = vector.shape_cast %94 : vector<128xf32> to vector<1x128xf32>
    %cst_32 = arith.constant dense<0.000000e+00> : vector<1x8xf32>
    %96 = tpu.matmul %95, %41, %cst_32 {dimension_numbers = #tpu.dot_dimension_numbers<[1], [0], [0], [1], [0, 0, 1, 1], [], []>} : vector<1x128xf32>, vector<128x8xf32>, vector<1x8xf32> -> vector<1x8xf32>
    %cst_33 = arith.constant 0.001953125 : f32
    %97 = vector.broadcast %cst_33 : f32 to vector<1x8xf32>
    %98 = arith.mulf %92, %97 : vector<1x8xf32>
    %cst_34 = arith.constant 0.001953125 : f32
    %99 = vector.broadcast %cst_34 : f32 to vector<1x8xf32>
    %100 = arith.mulf %96, %99 : vector<1x8xf32>
    %101 = arith.mulf %98, %98 : vector<1x8xf32>
    %102 = arith.subf %100, %101 : vector<1x8xf32>
    %cst_35 = arith.constant 0.000000e+00 : f32
    %103 = vector.broadcast %cst_35 : f32 to vector<1x8xf32>
    %104 = arith.maximumf %102, %103 : vector<1x8xf32>
    %c0_36 = arith.constant 0 : index
    %c0_37 = arith.constant 0 : index
    %105 = vector.load %arg3[%c0_36, %c0_37] : memref<1x8xf32, #tpu.memory_space<vmem>>, vector<1x8xf32>
    %cst_38 = arith.constant 9.99999974E-6 : f32
    %106 = vector.broadcast %cst_38 : f32 to vector<1x8xf32>
    %107 = arith.addf %104, %106 : vector<1x8xf32>
    %108 = math.rsqrt %107 : vector<1x8xf32>
    %109 = arith.mulf %105, %108 : vector<1x8xf32>
    %c0_39 = arith.constant 0 : index
    %c0_40 = arith.constant 0 : index
    %110 = vector.load %arg4[%c0_39, %c0_40] : memref<1x8xf32, #tpu.memory_space<vmem>>, vector<1x8xf32>
    %111 = arith.mulf %98, %109 : vector<1x8xf32>
    %112 = arith.subf %110, %111 : vector<1x8xf32>
    %cst_41 = arith.constant dense<0.000000e+00> : vector<1x128xf32>
    %113 = tpu.matmul %109, %62, %cst_41 {dimension_numbers = #tpu.dot_dimension_numbers<[1], [0], [0], [1], [0, 0, 1, 1], [], []>} : vector<1x8xf32>, vector<8x128xf32>, vector<1x128xf32> -> vector<1x128xf32>
    %cst_42 = arith.constant dense<0.000000e+00> : vector<1x128xf32>
    %114 = tpu.matmul %112, %62, %cst_42 {dimension_numbers = #tpu.dot_dimension_numbers<[1], [0], [0], [1], [0, 0, 1, 1], [], []>} : vector<1x8xf32>, vector<8x128xf32>, vector<1x128xf32> -> vector<1x128xf32>
    %115 = vector.broadcast %113 : vector<1x128xf32> to vector<32x128xf32>
    %116 = arith.mulf %89, %115 : vector<32x128xf32>
    %117 = vector.broadcast %114 : vector<1x128xf32> to vector<32x128xf32>
    %118 = arith.addf %116, %117 : vector<32x128xf32>
    %cst_43 = arith.constant 0.000000e+00 : f32
    %119 = vector.broadcast %cst_43 : f32 to vector<32x128xf32>
    %120 = arith.maximumf %118, %119 : vector<32x128xf32>
    %cst_44 = arith.constant 0.000000e+00 : f32
    %121 = vector.broadcast %cst_44 : f32 to vector<32x128xf32>
    %c1_i32_45 = arith.constant 1 : i32
    %122 = tpu.dynamic_rotate %120 by %c1_i32_45 dim 0 : vector<32x128xf32>, i32 -> vector<32x128xf32>
    %cst_46 = arith.constant 0.000000e+00 : f32
    %123 = vector.shape_cast %18 : vector<32x1xi1> to vector<32x1xi1>
    %124 = vector.broadcast %123 : vector<32x1xi1> to vector<32x128xi1>
    %125 = vector.broadcast %cst_46 : f32 to vector<32x128xf32>
    %126 = arith.select %124, %122, %125 : vector<32x128xi1>, vector<32x128xf32>
    %127 = arith.truncf %126 : vector<32x128xf32> to vector<32x128xbf16>
    %c0_47 = arith.constant 0 : index
    %c0_48 = arith.constant 0 : index
    %c0_49 = arith.constant 0 : index
    %128 = vector.load %arg2[%c0_47, %c0_48, %c0_49] : memref<3x128x128xbf16, #tpu.memory_space<vmem>>, vector<1x128x128xbf16>
    %129 = vector.shape_cast %128 : vector<1x128x128xbf16> to vector<128x128xbf16>
    %cst_50 = arith.constant dense<0.000000e+00> : vector<32x128xf32>
    %130 = tpu.matmul %127, %129, %cst_50 {dimension_numbers = #tpu.dot_dimension_numbers<[1], [0], [0], [1], [0, 0, 1, 1], [], []>} : vector<32x128xbf16>, vector<128x128xbf16>, vector<32x128xf32> -> vector<32x128xf32>
    %131 = arith.addf %121, %130 : vector<32x128xf32>
    %132 = arith.truncf %120 : vector<32x128xf32> to vector<32x128xbf16>
    %c1_51 = arith.constant 1 : index
    %c0_52 = arith.constant 0 : index
    %c0_53 = arith.constant 0 : index
    %133 = vector.load %arg2[%c1_51, %c0_52, %c0_53] : memref<3x128x128xbf16, #tpu.memory_space<vmem>>, vector<1x128x128xbf16>
    %134 = vector.shape_cast %133 : vector<1x128x128xbf16> to vector<128x128xbf16>
    %cst_54 = arith.constant dense<0.000000e+00> : vector<32x128xf32>
    %135 = tpu.matmul %132, %134, %cst_54 {dimension_numbers = #tpu.dot_dimension_numbers<[1], [0], [0], [1], [0, 0, 1, 1], [], []>} : vector<32x128xbf16>, vector<128x128xbf16>, vector<32x128xf32> -> vector<32x128xf32>
    %136 = arith.addf %131, %135 : vector<32x128xf32>
    %c31_i32_55 = arith.constant 31 : i32
    %137 = tpu.dynamic_rotate %120 by %c31_i32_55 dim 0 : vector<32x128xf32>, i32 -> vector<32x128xf32>
    %cst_56 = arith.constant 0.000000e+00 : f32
    %138 = vector.shape_cast %20 : vector<32x1xi1> to vector<32x1xi1>
    %139 = vector.broadcast %138 : vector<32x1xi1> to vector<32x128xi1>
    %140 = vector.broadcast %cst_56 : f32 to vector<32x128xf32>
    %141 = arith.select %139, %137, %140 : vector<32x128xi1>, vector<32x128xf32>
    %142 = arith.truncf %141 : vector<32x128xf32> to vector<32x128xbf16>
    %c2_57 = arith.constant 2 : index
    %c0_58 = arith.constant 0 : index
    %c0_59 = arith.constant 0 : index
    %143 = vector.load %arg2[%c2_57, %c0_58, %c0_59] : memref<3x128x128xbf16, #tpu.memory_space<vmem>>, vector<1x128x128xbf16>
    %144 = vector.shape_cast %143 : vector<1x128x128xbf16> to vector<128x128xbf16>
    %cst_60 = arith.constant dense<0.000000e+00> : vector<32x128xf32>
    %145 = tpu.matmul %142, %144, %cst_60 {dimension_numbers = #tpu.dot_dimension_numbers<[1], [0], [0], [1], [0, 0, 1, 1], [], []>} : vector<32x128xbf16>, vector<128x128xbf16>, vector<32x128xf32> -> vector<32x128xf32>
    %146 = arith.addf %136, %145 : vector<32x128xf32>
    %cst_61 = arith.constant dense<0.000000e+00> : vector<128xf32>
    %147 = vector.multi_reduction <add>, %146, %cst_61 [0] : vector<32x128xf32> to vector<128xf32>
    %148 = vector.shape_cast %147 : vector<128xf32> to vector<1x128xf32>
    %cst_62 = arith.constant dense<0.000000e+00> : vector<1x8xf32>
    %149 = tpu.matmul %148, %41, %cst_62 {dimension_numbers = #tpu.dot_dimension_numbers<[1], [0], [0], [1], [0, 0, 1, 1], [], []>} : vector<1x128xf32>, vector<128x8xf32>, vector<1x8xf32> -> vector<1x8xf32>
    %150 = arith.mulf %146, %146 : vector<32x128xf32>
    %cst_63 = arith.constant dense<0.000000e+00> : vector<128xf32>
    %151 = vector.multi_reduction <add>, %150, %cst_63 [0] : vector<32x128xf32> to vector<128xf32>
    %152 = vector.shape_cast %151 : vector<128xf32> to vector<1x128xf32>
    %cst_64 = arith.constant dense<0.000000e+00> : vector<1x8xf32>
    %153 = tpu.matmul %152, %41, %cst_64 {dimension_numbers = #tpu.dot_dimension_numbers<[1], [0], [0], [1], [0, 0, 1, 1], [], []>} : vector<1x128xf32>, vector<128x8xf32>, vector<1x8xf32> -> vector<1x8xf32>
    %cst_65 = arith.constant 0.001953125 : f32
    %154 = vector.broadcast %cst_65 : f32 to vector<1x8xf32>
    %155 = arith.mulf %149, %154 : vector<1x8xf32>
    %cst_66 = arith.constant 0.001953125 : f32
    %156 = vector.broadcast %cst_66 : f32 to vector<1x8xf32>
    %157 = arith.mulf %153, %156 : vector<1x8xf32>
    %158 = arith.mulf %155, %155 : vector<1x8xf32>
    %159 = arith.subf %157, %158 : vector<1x8xf32>
    %cst_67 = arith.constant 0.000000e+00 : f32
    %160 = vector.broadcast %cst_67 : f32 to vector<1x8xf32>
    %161 = arith.maximumf %159, %160 : vector<1x8xf32>
    %c0_68 = arith.constant 0 : index
    %c0_69 = arith.constant 0 : index
    %162 = vector.load %arg5[%c0_68, %c0_69] : memref<1x8xf32, #tpu.memory_space<vmem>>, vector<1x8xf32>
    %cst_70 = arith.constant 9.99999974E-6 : f32
    %163 = vector.broadcast %cst_70 : f32 to vector<1x8xf32>
    %164 = arith.addf %161, %163 : vector<1x8xf32>
    %165 = math.rsqrt %164 : vector<1x8xf32>
    %166 = arith.mulf %162, %165 : vector<1x8xf32>
    %c0_71 = arith.constant 0 : index
    %c0_72 = arith.constant 0 : index
    %167 = vector.load %arg6[%c0_71, %c0_72] : memref<1x8xf32, #tpu.memory_space<vmem>>, vector<1x8xf32>
    %168 = arith.mulf %155, %166 : vector<1x8xf32>
    %169 = arith.subf %167, %168 : vector<1x8xf32>
    %cst_73 = arith.constant dense<0.000000e+00> : vector<1x128xf32>
    %170 = tpu.matmul %166, %62, %cst_73 {dimension_numbers = #tpu.dot_dimension_numbers<[1], [0], [0], [1], [0, 0, 1, 1], [], []>} : vector<1x8xf32>, vector<8x128xf32>, vector<1x128xf32> -> vector<1x128xf32>
    %cst_74 = arith.constant dense<0.000000e+00> : vector<1x128xf32>
    %171 = tpu.matmul %169, %62, %cst_74 {dimension_numbers = #tpu.dot_dimension_numbers<[1], [0], [0], [1], [0, 0, 1, 1], [], []>} : vector<1x8xf32>, vector<8x128xf32>, vector<1x128xf32> -> vector<1x128xf32>
    %172 = vector.broadcast %170 : vector<1x128xf32> to vector<32x128xf32>
    %173 = arith.mulf %146, %172 : vector<32x128xf32>
    %174 = vector.broadcast %171 : vector<1x128xf32> to vector<32x128xf32>
    %175 = arith.addf %173, %174 : vector<32x128xf32>
    %cst_75 = arith.constant 0.000000e+00 : f32
    %176 = vector.broadcast %cst_75 : f32 to vector<32x128xf32>
    %177 = arith.maximumf %175, %176 : vector<32x128xf32>
    %c0_76 = arith.constant 0 : index
    %c0_77 = arith.constant 0 : index
    %178 = vector.load %arg7[%c0_76, %c0_77] : memref<32x128xf32, #tpu.memory_space<vmem>>, vector<32x128xf32>
    tpu.vector_store %arg7[%c0_76, %c0_77], %177 {strides = array<i32>} : memref<32x128xf32, #tpu.memory_space<vmem>>, vector<32x128xf32>,
    return
  }
}

</mosaic_0001>

<llo_original>
// kernel: double_conv_forward.1
$region0: #{double_conv_forward.1}
  #allocation0 [shape = 'u32[]', space=smem, size = 0x4, offset = 0x4, fixed_abs, tag = 'smem constant byte address 0x4 - core index']
  #allocation1 [shape = 'u32[144,128]{1,0:T(1,128)}', space=vmem, size = 0x12000, scoped, tag = 'internal scratch']
  %s0 = inlined_call_operand.vmem [shape: f32[32,64], index: 0, kind: input, shape index: {}]
  %s1 = inlined_call_operand.vmem [shape: bf16[3,64,128], index: 1, kind: input, shape index: {}]
  %s2 = inlined_call_operand.vmem [shape: bf16[3,128,128], index: 2, kind: input, shape index: {}]
  %s3 = inlined_call_operand.vmem [shape: f32[1,8], index: 3, kind: input, shape index: {}]
  %s4 = inlined_call_operand.vmem [shape: f32[1,8], index: 4, kind: input, shape index: {}]
  %s5 = inlined_call_operand.vmem [shape: f32[1,8], index: 5, kind: input, shape index: {}]
  %s6 = inlined_call_operand.vmem [shape: f32[1,8], index: 6, kind: input, shape index: {}]
  %s7 = inlined_call_operand.vmem [shape: f32[32,128], index: 7, kind: output, shape index: {}]
  %s8 = sld [smem:[#allocation0]]
  $region38: #{double_conv_forward.1} parent=0
    _
  %s10 = ssub.s32 1, %s8
  %s11 = scalar_select 0, %s10, %s8
  // Predicated region
  $region2: #{double_conv_forward.1} parent=0 // pred_check
    _
  $region3: #{double_conv_forward.1} parent=0 // pred_check_branch
    %13 = sbr.rel (0) target = $region5
  $region4: #{double_conv_forward.1} parent=0 // pred_region
    _
  $region5: #{double_conv_forward.1} parent=0 // pred_fallthru
    _
  // Predicated region
  $region6: #{double_conv_forward.1} parent=0 // pred_check
    _
  $region7: #{double_conv_forward.1} parent=0 // pred_check_branch
    %15 = sbr.rel (0) target = $region9
  $region8: #{double_conv_forward.1} parent=0 // pred_region
    _
  $region9: #{double_conv_forward.1} parent=0 // pred_fallthru
    _
  // Predicated region
  $region10: #{double_conv_forward.1} parent=0 // pred_check
    _
  $region11: #{double_conv_forward.1} parent=0 // pred_check_branch
    %17 = sbr.rel (0) target = $region13
  $region12: #{double_conv_forward.1} parent=0 // pred_region
    _
  $region13: #{double_conv_forward.1} parent=0 // pred_fallthru
    _
  // Predicated region
  $region14: #{double_conv_forward.1} parent=0 // pred_check
    _
  $region15: #{double_conv_forward.1} parent=0 // pred_check_branch
    %19 = sbr.rel (0) target = $region17
  $region16: #{double_conv_forward.1} parent=0 // pred_region
    _
  $region17: #{double_conv_forward.1} parent=0 // pred_fallthru
    _
  // Predicated region
  $region18: #{double_conv_forward.1} parent=0 // pred_check
    _
  $region19: #{double_conv_forward.1} parent=0 // pred_check_branch
    %21 = sbr.rel (0) target = $region21
  $region20: #{double_conv_forward.1} parent=0 // pred_region
    _
  $region21: #{double_conv_forward.1} parent=0 // pred_fallthru
    _
  // Predicated region
  $region22: #{double_conv_forward.1} parent=0 // pred_check
    _
  $region23: #{double_conv_forward.1} parent=0 // pred_check_branch
    %23 = sbr.rel (0) target = $region25
  $region24: #{double_conv_forward.1} parent=0 // pred_region
    _
  $region25: #{double_conv_forward.1} parent=0 // pred_fallthru
    _
  // Predicated region
  $region26: #{double_conv_forward.1} parent=0 // pred_check
    _
  $region27: #{double_conv_forward.1} parent=0 // pred_check_branch
    %25 = sbr.rel (0) target = $region29
  $region28: #{double_conv_forward.1} parent=0 // pred_region
    _
  $region29: #{double_conv_forward.1} parent=0 // pred_fallthru
    _
  %v27 = vlaneseq
  %v28 = vshrl.u32 %v27, 7
  %v29 = vadd.s32 %v28, 8
  %v30 = vadd.s32 %v28, 16
  %v31 = vadd.s32 %v28, 24
  %vm32 = vcmp.lt.s32.totalorder %v28, 0
  %v33 = vsub.s32 0, %v28
  %v34 = vsel %vm32, %v33, %v28
  %v35 = vshrl.u32 %v34, 4
  %v36 = vand.u32 %v34, 15
  %v37 = vsub.s32 0, %v36
  %v38 = vsel %vm32, %v37, %v36
  %vm39 = vcmp.lt.s32.totalorder %v29, 0
  %v40 = vsub.s32 0, %v29
  %v41 = vsel %vm39, %v40, %v29
  %v42 = vshrl.u32 %v41, 4
  %v43 = vand.u32 %v41, 15
  %v44 = vsub.s32 0, %v43
  %v45 = vsel %vm39, %v44, %v43
  %vm46 = vcmp.lt.s32.totalorder %v30, 0
  %v47 = vsub.s32 0, %v30
  %v48 = vsel %vm46, %v47, %v30
  %v49 = vshrl.u32 %v48, 4
  %v50 = vand.u32 %v48, 15
  %v51 = vsub.s32 0, %v50
  %v52 = vsel %vm46, %v51, %v50
  %vm53 = vcmp.lt.s32.totalorder %v31, 0
  %v54 = vsub.s32 0, %v31
  %v55 = vsel %vm53, %v54, %v31
  %v56 = vshrl.u32 %v55, 4
  %v57 = vand.u32 %v55, 15
  %v58 = vsub.s32 0, %v57
  %v59 = vsel %vm53, %v58, %v57
  %vm60 = vcmp.ne.s32.totalorder %v38, 0
  %vm61 = vcmp.ne.s32.totalorder %v45, 0
  %vm62 = vcmp.ne.s32.totalorder %v52, 0
  %vm63 = vcmp.ne.s32.totalorder %v59, 0
  %vm64 = vcmp.lt.s32.totalorder %v38, 0
  %vm65 = vcmp.lt.s32.totalorder %v45, 0
  %vm66 = vcmp.lt.s32.totalorder %v52, 0
  %vm67 = vcmp.lt.s32.totalorder %v59, 0
  %vm68 = vmand %vm64, %vm60
  %vm69 = vmand %vm65, %vm61
  %vm70 = vmand %vm66, %vm62
  %vm71 = vmand %vm67, %vm63
  %v72 = vadd.s32 %v38, 16
  %v73 = vadd.s32 %v45, 16
  %v74 = vadd.s32 %v52, 16
  %v75 = vadd.s32 %v59, 16
  %v76 = vsel %vm68, %v72, %v38
  %v77 = vsel %vm69, %v73, %v45
  %v78 = vsel %vm70, %v74, %v52
  %v79 = vsel %vm71, %v75, %v59
  %vm80 = vcmp.ge.s32.totalorder %v76, 1
  %vm81 = vcmp.ge.s32.totalorder %v77, 1
  %vm82 = vcmp.ge.s32.totalorder %v78, 1
  %vm83 = vcmp.ge.s32.totalorder %v79, 1
  %vm84 = vcmp.le.s32.totalorder %v76, 14
  %vm85 = vcmp.le.s32.totalorder %v77, 14
  %vm86 = vcmp.le.s32.totalorder %v78, 14
  %vm87 = vcmp.le.s32.totalorder %v79, 14
  %v88 = vadd.s32 %v28, 32
  %v89 = vadd.s32 %v28, 40
  %v90 = vadd.s32 %v28, 48
  %v91 = vadd.s32 %v28, 56
  %v92 = vadd.s32 %v28, 64
  %v93 = vadd.s32 %v28, 72
  %v94 = vadd.s32 %v28, 80
  %v95 = vadd.s32 %v28, 88
  %v96 = vadd.s32 %v28, 96
  %v97 = vadd.s32 %v28, 104
  %v98 = vadd.s32 %v28, 112
  %v99 = vadd.s32 %v28, 120
  %v100 = vlaneseq
  %v101 = vand.u32 %v100, 127
  %vm102 = vcmp.lt.s32.totalorder %v28, 0
  %v103 = vsub.s32 0, %v28
  %v104 = vsel %vm102, %v103, %v28
  %v105 = vshrl.u32 %v104, 3
  %v106 = vand.u32 %v104, 7
  %v107 = vsub.s32 0, %v106
  %v108 = vsel %vm102, %v107, %v106
  %vm109 = vcmp.lt.s32.totalorder %v29, 0
  %v110 = vsub.s32 0, %v29
  %v111 = vsel %vm109, %v110, %v29
  %v112 = vshrl.u32 %v111, 3
  %v113 = vand.u32 %v111, 7
  %v114 = vsub.s32 0, %v113
  %v115 = vsel %vm109, %v114, %v113
  %vm116 = vcmp.lt.s32.totalorder %v30, 0
  %v117 = vsub.s32 0, %v30
  %v118 = vsel %vm116, %v117, %v30
  %v119 = vshrl.u32 %v118, 3
  %v120 = vand.u32 %v118, 7
  %v121 = vsub.s32 0, %v120
  %v122 = vsel %vm116, %v121, %v120
  %vm123 = vcmp.lt.s32.totalorder %v31, 0
  %v124 = vsub.s32 0, %v31
  %v125 = vsel %vm123, %v124, %v31
  %v126 = vshrl.u32 %v125, 3
  %v127 = vand.u32 %v125, 7
  %v128 = vsub.s32 0, %v127
  %v129 = vsel %vm123, %v128, %v127
  %vm130 = vcmp.lt.s32.totalorder %v88, 0
  %v131 = vsub.s32 0, %v88
  %v132 = vsel %vm130, %v131, %v88
  %v133 = vshrl.u32 %v132, 3
  %v134 = vand.u32 %v132, 7
  %v135 = vsub.s32 0, %v134
  %v136 = vsel %vm130, %v135, %v134
  %vm137 = vcmp.lt.s32.totalorder %v89, 0
  %v138 = vsub.s32 0, %v89
  %v139 = vsel %vm137, %v138, %v89
  %v140 = vshrl.u32 %v139, 3
  %v141 = vand.u32 %v139, 7
  %v142 = vsub.s32 0, %v141
  %v143 = vsel %vm137, %v142, %v141
  %vm144 = vcmp.lt.s32.totalorder %v90, 0
  %v145 = vsub.s32 0, %v90
  %v146 = vsel %vm144, %v145, %v90
  %v147 = vshrl.u32 %v146, 3
  %v148 = vand.u32 %v146, 7
  %v149 = vsub.s32 0, %v148
  %v150 = vsel %vm144, %v149, %v148
  %vm151 = vcmp.lt.s32.totalorder %v91, 0
  %v152 = vsub.s32 0, %v91
  %v153 = vsel %vm151, %v152, %v91
  %v154 = vshrl.u32 %v153, 3
  %v155 = vand.u32 %v153, 7
  %v156 = vsub.s32 0, %v155
  %v157 = vsel %vm151, %v156, %v155
  %vm158 = vcmp.lt.s32.totalorder %v92, 0
  %v159 = vsub.s32 0, %v92
  %v160 = vsel %vm158, %v159, %v92
  %v161 = vshrl.u32 %v160, 3
  %v162 = vand.u32 %v160, 7
  %v163 = vsub.s32 0, %v162
  %v164 = vsel %vm158, %v163, %v162
  %vm165 = vcmp.lt.s32.totalorder %v93, 0
  %v166 = vsub.s32 0, %v93
  %v167 = vsel %vm165, %v166, %v93
  %v168 = vshrl.u32 %v167, 3
  %v169 = vand.u32 %v167, 7
  %v170 = vsub.s32 0, %v169
  %v171 = vsel %vm165, %v170, %v169
  %vm172 = vcmp.lt.s32.totalorder %v94, 0
  %v173 = vsub.s32 0, %v94
  %v174 = vsel %vm172, %v173, %v94
  %v175 = vshrl.u32 %v174, 3
  %v176 = vand.u32 %v174, 7
  %v177 = vsub.s32 0, %v176
  %v178 = vsel %vm172, %v177, %v176
  %vm179 = vcmp.lt.s32.totalorder %v95, 0
  %v180 = vsub.s32 0, %v95
  %v181 = vsel %vm179, %v180, %v95
  %v182 = vshrl.u32 %v181, 3
  %v183 = vand.u32 %v181, 7
  %v184 = vsub.s32 0, %v183
  %v185 = vsel %vm179, %v184, %v183
  %vm186 = vcmp.lt.s32.totalorder %v96, 0
  %v187 = vsub.s32 0, %v96
  %v188 = vsel %vm186, %v187, %v96
  %v189 = vshrl.u32 %v188, 3
  %v190 = vand.u32 %v188, 7
  %v191 = vsub.s32 0, %v190
  %v192 = vsel %vm186, %v191, %v190
  %vm193 = vcmp.lt.s32.totalorder %v97, 0
  %v194 = vsub.s32 0, %v97
  %v195 = vsel %vm193, %v194, %v97
  %v196 = vshrl.u32 %v195, 3
  %v197 = vand.u32 %v195, 7
  %v198 = vsub.s32 0, %v197
  %v199 = vsel %vm193, %v198, %v197
  %vm200 = vcmp.lt.s32.totalorder %v98, 0
  %v201 = vsub.s32 0, %v98
  %v202 = vsel %vm200, %v201, %v98
  %v203 = vshrl.u32 %v202, 3
  %v204 = vand.u32 %v202, 7
  %v205 = vsub.s32 0, %v204
  %v206 = vsel %vm200, %v205, %v204
  %vm207 = vcmp.lt.s32.totalorder %v99, 0
  %v208 = vsub.s32 0, %v99
  %v209 = vsel %vm207, %v208, %v99
  %v210 = vshrl.u32 %v209, 3
  %v211 = vand.u32 %v209, 7
  %v212 = vsub.s32 0, %v211
  %v213 = vsel %vm207, %v212, %v211
  %vm214 = vcmp.ne.s32.totalorder %v108, 0
  %vm215 = vcmp.ne.s32.totalorder %v115, 0
  %vm216 = vcmp.ne.s32.totalorder %v122, 0
  %vm217 = vcmp.ne.s32.totalorder %v129, 0
  %vm218 = vcmp.ne.s32.totalorder %v136, 0
  %vm219 = vcmp.ne.s32.totalorder %v143, 0
  %vm220 = vcmp.ne.s32.totalorder %v150, 0
  %vm221 = vcmp.ne.s32.totalorder %v157, 0
  %vm222 = vcmp.ne.s32.totalorder %v164, 0
  %vm223 = vcmp.ne.s32.totalorder %v171, 0
  %vm224 = vcmp.ne.s32.totalorder %v178, 0
  %vm225 = vcmp.ne.s32.totalorder %v185, 0
  %vm226 = vcmp.ne.s32.totalorder %v192, 0
  %vm227 = vcmp.ne.s32.totalorder %v199, 0
  %vm228 = vcmp.ne.s32.totalorder %v206, 0
  %vm229 = vcmp.ne.s32.totalorder %v213, 0
  %vm230 = vcmp.lt.s32.totalorder %v108, 0
  %vm231 = vcmp.lt.s32.totalorder %v115, 0
  %vm232 = vcmp.lt.s32.totalorder %v122, 0
  %vm233 = vcmp.lt.s32.totalorder %v129, 0
  %vm234 = vcmp.lt.s32.totalorder %v136, 0
  %vm235 = vcmp.lt.s32.totalorder %v143, 0
  %vm236 = vcmp.lt.s32.totalorder %v150, 0
  %vm237 = vcmp.lt.s32.totalorder %v157, 0
  %vm238 = vcmp.lt.s32.totalorder %v164, 0
  %vm239 = vcmp.lt.s32.totalorder %v171, 0
  %vm240 = vcmp.lt.s32.totalorder %v178, 0
  %vm241 = vcmp.lt.s32.totalorder %v185, 0
  %vm242 = vcmp.lt.s32.totalorder %v192, 0
  %vm243 = vcmp.lt.s32.totalorder %v199, 0
  %vm244 = vcmp.lt.s32.totalorder %v206, 0
  %vm245 = vcmp.lt.s32.totalorder %v213, 0
  %vm246 = vmand %vm230, %vm214
  %vm247 = vmand %vm231, %vm215
  %vm248 = vmand %vm232, %vm216
  %vm249 = vmand %vm233, %vm217
  %vm250 = vmand %vm234, %vm218
  %vm251 = vmand %vm235, %vm219
  %vm252 = vmand %vm236, %vm220
  %vm253 = vmand %vm237, %vm221
  %vm254 = vmand %vm238, %vm222
  %vm255 = vmand %vm239, %vm223
  %vm256 = vmand %vm240, %vm224
  %vm257 = vmand %vm241, %vm225
  %vm258 = vmand %vm242, %vm226
  %vm259 = vmand %vm243, %vm227
  %vm260 = vmand %vm244, %vm228
  %vm261 = vmand %vm245, %vm229
  %v262 = vadd.s32 %v108, 8
  %v263 = vadd.s32 %v115, 8
  %v264 = vadd.s32 %v122, 8
  %v265 = vadd.s32 %v129, 8
  %v266 = vadd.s32 %v136, 8
  %v267 = vadd.s32 %v143, 8
  %v268 = vadd.s32 %v150, 8
  %v269 = vadd.s32 %v157, 8
  %v270 = vadd.s32 %v164, 8
  %v271 = vadd.s32 %v171, 8
  %v272 = vadd.s32 %v178, 8
  %v273 = vadd.s32 %v185, 8
  %v274 = vadd.s32 %v192, 8
  %v275 = vadd.s32 %v199, 8
  %v276 = vadd.s32 %v206, 8
  %v277 = vadd.s32 %v213, 8
  %v278 = vsel %vm246, %v262, %v108
  %v279 = vsel %vm247, %v263, %v115
  %v280 = vsel %vm248, %v264, %v122
  %v281 = vsel %vm249, %v265, %v129
  %v282 = vsel %vm250, %v266, %v136
  %v283 = vsel %vm251, %v267, %v143
  %v284 = vsel %vm252, %v268, %v150
  %v285 = vsel %vm253, %v269, %v157
  %v286 = vsel %vm254, %v270, %v164
  %v287 = vsel %vm255, %v271, %v171
  %v288 = vsel %vm256, %v272, %v178
  %v289 = vsel %vm257, %v273, %v185
  %v290 = vsel %vm258, %v274, %v192
  %v291 = vsel %vm259, %v275, %v199
  %v292 = vsel %vm260, %v276, %v206
  %v293 = vsel %vm261, %v277, %v213
  %vm294 = vcmp.eq.s32.totalorder %v278, %v101
  %vm295 = vcmp.eq.s32.totalorder %v279, %v101
  %vm296 = vcmp.eq.s32.totalorder %v280, %v101
  %vm297 = vcmp.eq.s32.totalorder %v281, %v101
  %vm298 = vcmp.eq.s32.totalorder %v282, %v101
  %vm299 = vcmp.eq.s32.totalorder %v283, %v101
  %vm300 = vcmp.eq.s32.totalorder %v284, %v101
  %vm301 = vcmp.eq.s32.totalorder %v285, %v101
  %vm302 = vcmp.eq.s32.totalorder %v286, %v101
  %vm303 = vcmp.eq.s32.totalorder %v287, %v101
  %vm304 = vcmp.eq.s32.totalorder %v288, %v101
  %vm305 = vcmp.eq.s32.totalorder %v289, %v101
  %vm306 = vcmp.eq.s32.totalorder %v290, %v101
  %vm307 = vcmp.eq.s32.totalorder %v291, %v101
  %vm308 = vcmp.eq.s32.totalorder %v292, %v101
  %vm309 = vcmp.eq.s32.totalorder %v293, %v101
  %v310 = vsel %vm294, 1, 0
  %v311 = vsel %vm295, 1, 0
  %v312 = vsel %vm296, 1, 0
  %v313 = vsel %vm297, 1, 0
  %v314 = vsel %vm298, 1, 0
  %v315 = vsel %vm299, 1, 0
  %v316 = vsel %vm300, 1, 0
  %v317 = vsel %vm301, 1, 0
  %v318 = vsel %vm302, 1, 0
  %v319 = vsel %vm303, 1, 0
  %v320 = vsel %vm304, 1, 0
  %v321 = vsel %vm305, 1, 0
  %v322 = vsel %vm306, 1, 0
  %v323 = vsel %vm307, 1, 0
  %v324 = vsel %vm308, 1, 0
  %v325 = vsel %vm309, 1, 0
  %v326 = vcvt.s32.f32 %v310
  %v327 = vcvt.s32.f32 %v311
  %v328 = vcvt.s32.f32 %v312
  %v329 = vcvt.s32.f32 %v313
  %v330 = vcvt.s32.f32 %v314
  %v331 = vcvt.s32.f32 %v315
  %v332 = vcvt.s32.f32 %v316
  %v333 = vcvt.s32.f32 %v317
  %v334 = vcvt.s32.f32 %v318
  %v335 = vcvt.s32.f32 %v319
  %v336 = vcvt.s32.f32 %v320
  %v337 = vcvt.s32.f32 %v321
  %v338 = vcvt.s32.f32 %v322
  %v339 = vcvt.s32.f32 %v323
  %v340 = vcvt.s32.f32 %v324
  %v341 = vcvt.s32.f32 %v325
  %vm342 = vcmp.lt.s32.totalorder %v101, 0
  %v343 = vsub.s32 0, %v101
  %v344 = vsel %vm342, %v343, %v101
  %v345 = vshrl.u32 %v344, 3
  %v346 = vand.u32 %v344, 7
  %v347 = vsub.s32 0, %v346
  %v348 = vsel %vm342, %v347, %v346
  %vm349 = vcmp.ne.s32.totalorder %v348, 0
  %vm350 = vcmp.lt.s32.totalorder %v348, 0
  %vm351 = vmand %vm350, %vm349
  %v352 = vadd.s32 %v348, 8
  %v353 = vsel %vm351, %v352, %v348
  %vm354 = vcmp.eq.s32.totalorder %v353, %v28
  %v355 = vsel %vm354, 1, 0
  %v356 = vcvt.s32.f32 %v355
  %v357 = vld [vmem:[%s0] sm:$0xff]
  %v358 = vld [vmem:[%s0 + $0x8] sm:$0xff]
  %v359 = vld [vmem:[%s0 + $0x10] sm:$0xff]
  %v360 = vld [vmem:[%s0 + $0x18] sm:$0xff]
  %v361 = vrot.slane %v357, 7
  %v362 = vrot.slane %v358, 7
  %v363 = vrot.slane %v359, 7
  %v364 = vrot.slane %v360, 7
  %vm365 = vcmp.lt.s32.totalorder %v28, 1
  %v366 = vsel %vm365, %v363, %v364
  %v367 = vsel %vm365, %v362, %v363
  %v368 = vsel %vm365, %v361, %v362
  %v369 = vsel %vm365, %v364, %v361
  %v370 = vsel %vm80, 1, 0
  %v371 = vsel %vm81, 1, 0
  %v372 = vsel %vm82, 1, 0
  %v373 = vsel %vm83, 1, 0
  %vm374 = vcmp.eq.s32.totalorder %v370, 1
  %vm375 = vcmp.eq.s32.totalorder %v371, 1
  %vm376 = vcmp.eq.s32.totalorder %v372, 1
  %vm377 = vcmp.eq.s32.totalorder %v373, 1
  %v378 = vsel %vm374, %v369, 0.0
  %v379 = vsel %vm375, %v368, 0.0
  %v380 = vsel %vm376, %v367, 0.0
  %v381 = vsel %vm377, %v366, 0.0
  %v382 = vpack.c.bf16 %v379, %v378
  %v383 = vpack.c.bf16 %v381, %v380
  %v384 = vld [vmem:[%s1] sm:$0xf]
  %v385 = vld [vmem:[%s1 + $0x4] sm:$0xf]
  %v386 = vld [vmem:[%s1 + $0x8] sm:$0xf]
  %v387 = vld [vmem:[%s1 + $0xc] sm:$0xf]
  %v388 = vld [vmem:[%s1 + $0x10] sm:$0xf]
  %v389 = vld [vmem:[%s1 + $0x14] sm:$0xf]
  %v390 = vld [vmem:[%s1 + $0x18] sm:$0xf]
  %v391 = vld [vmem:[%s1 + $0x1c] sm:$0xf]
  %v392 = vpack.c.bf16 %v358, %v357
  %v393 = vpack.c.bf16 %v360, %v359
  %s394 = scalar_lea.vmem %s1, 32
  %v395 = vld [vmem:[%s394] sm:$0xf]
  %v396 = vld [vmem:[%s394 + $0x4] sm:$0xf]
  %v397 = vld [vmem:[%s394 + $0x8] sm:$0xf]
  %v398 = vld [vmem:[%s394 + $0xc] sm:$0xf]
  %v399 = vld [vmem:[%s394 + $0x10] sm:$0xf]
  %v400 = vld [vmem:[%s394 + $0x14] sm:$0xf]
  %v401 = vld [vmem:[%s394 + $0x18] sm:$0xf]
  %v402 = vld [vmem:[%s394 + $0x1c] sm:$0xf]
  %v411 = vunpack.c.l.b16 %v395
  %v412 = vunpack.c.l.b16 %v396
  %v413 = vunpack.c.l.b16 %v397
  %v414 = vunpack.c.l.b16 %v398
  %v415 = vunpack.c.l.b16 %v399
  %v416 = vunpack.c.l.b16 %v400
  %v417 = vunpack.c.l.b16 %v401
  %v418 = vunpack.c.l.b16 %v402
  %v419 = vpack.c.b16 %v412, %v411
  %v420 = vpack.c.b16 %v414, %v413
  %v421 = vpack.c.b16 %v416, %v415
  %v422 = vpack.c.b16 %v418, %v417
  %vm427 = vcmask 523264
  %v429 = vsel %vm427, %v392, 0
  %v432 = vsel %vm427, %v393, 0
  %434 = vmatprep.subr.bf16.mxu0 0
  %435 = vmatpush1.bf16.msra.mxu0 0
  %436 = vmatprep.subr.bf16.mxu0 0
  %437 = vmatpush1.bf16.msra.mxu0 0
  %438 = vmatprep.subr.bf16.mxu0 0
  %439 = vmatpush1.bf16.msra.mxu0 0
  %440 = vmatprep.subr.bf16.mxu0 0
  %441 = vmatpush1.bf16.msra.mxu0 0
  %442 = vmatprep.subr.bf16.mxu0 0
  %443 = vmatpush1.bf16.msra.mxu0 %v422
  %444 = vmatprep.subr.bf16.mxu0 0
  %445 = vmatpush1.bf16.msra.mxu0 %v421
  %446 = vmatprep.subr.bf16.mxu0 0
  %447 = vmatpush1.bf16.msra.mxu0 %v420
  %448 = vmatprep.subr.bf16.mxu0 0
  %449 = vmatpush1.bf16.msra.mxu0 %v419
  %450 = vmatprep.subr.bf16.mxu0 0
  %451 = vmatpush2.bf16.msra.mxu0 0
  %452 = vmatprep.subr.bf16.mxu0 0
  %453 = vmatpush2.bf16.msra.mxu0 0
  %454 = vmatprep.subr.bf16.mxu0 0
  %455 = vmatpush2.bf16.msra.mxu0 0
  %456 = vmatprep.subr.bf16.mxu0 0
  %457 = vmatpush2.bf16.msra.mxu0 0
  %458 = vmatprep.subr.bf16.mxu0 0
  %459 = vmatpush2.bf16.msra.mxu0 0
  %460 = vmatprep.subr.bf16.mxu0 0
  %461 = vmatpush2.bf16.msra.mxu0 0
  %462 = vmatprep.subr.bf16.mxu0 0
  %463 = vmatpush2.bf16.msra.mxu0 0
  %464 = vmatprep.subr.bf16.mxu0 0
  %465 = vmatpush2.bf16.msra.mxu0 0
  %466 = vmatprep.mubr.bf16.mxu0 0
  %467 = vmatmul.mubr.bf16.gmra.mxu0 %v429
  %v468 = vpop.f32.mrf.mxu0
  %v469 = vadd.f32 0.0, %v468
  %v470 = vpop.f32.mrf.mxu0
  %v471 = vpop.f32.mrf.mxu0
  %v472 = vadd.f32 0.0, %v471
  %v473 = vpop.f32.mrf.mxu0
  %474 = vmatprep.mubr.bf16.mxu0 0
  %475 = vmatmul.mubr.bf16.gmra.mxu0 %v432
  %v476 = vpop.f32.mrf.mxu0
  %v477 = vadd.f32 0.0, %v476
  %v478 = vpop.f32.mrf.mxu0
  %v479 = vpop.f32.mrf.mxu0
  %v480 = vadd.f32 0.0, %v479
  %v481 = vpop.f32.mrf.mxu0
  %482 = vdwg.mxu0
  %v491 = vunpack.c.l.b16 %v384
  %v492 = vunpack.c.l.b16 %v385
  %v493 = vunpack.c.l.b16 %v386
  %v494 = vunpack.c.l.b16 %v387
  %v495 = vunpack.c.l.b16 %v388
  %v496 = vunpack.c.l.b16 %v389
  %v497 = vunpack.c.l.b16 %v390
  %v498 = vunpack.c.l.b16 %v391
  %v499 = vpack.c.b16 %v492, %v491
  %v500 = vpack.c.b16 %v494, %v493
  %v501 = vpack.c.b16 %v496, %v495
  %v502 = vpack.c.b16 %v498, %v497
  %v508 = vsel %vm427, %v382, 0
  %v511 = vsel %vm427, %v383, 0
  %513 = vmatprep.subr.bf16.mxu0 0
  %514 = vmatpush1.bf16.msra.mxu0 0
  %515 = vmatprep.subr.bf16.mxu0 0
  %516 = vmatpush1.bf16.msra.mxu0 0
  %517 = vmatprep.subr.bf16.mxu0 0
  %518 = vmatpush1.bf16.msra.mxu0 0
  %519 = vmatprep.subr.bf16.mxu0 0
  %520 = vmatpush1.bf16.msra.mxu0 0
  %521 = vmatprep.subr.bf16.mxu0 0
  %522 = vmatpush1.bf16.msra.mxu0 %v502
  %523 = vmatprep.subr.bf16.mxu0 0
  %524 = vmatpush1.bf16.msra.mxu0 %v501
  %525 = vmatprep.subr.bf16.mxu0 0
  %526 = vmatpush1.bf16.msra.mxu0 %v500
  %527 = vmatprep.subr.bf16.mxu0 0
  %528 = vmatpush1.bf16.msra.mxu0 %v499
  %529 = vmatprep.subr.bf16.mxu0 0
  %530 = vmatpush2.bf16.msra.mxu0 0
  %531 = vmatprep.subr.bf16.mxu0 0
  %532 = vmatpush2.bf16.msra.mxu0 0
  %533 = vmatprep.subr.bf16.mxu0 0
  %534 = vmatpush2.bf16.msra.mxu0 0
  %535 = vmatprep.subr.bf16.mxu0 0
  %536 = vmatpush2.bf16.msra.mxu0 0
  %537 = vmatprep.subr.bf16.mxu0 0
  %538 = vmatpush2.bf16.msra.mxu0 0
  %539 = vmatprep.subr.bf16.mxu0 0
  %540 = vmatpush2.bf16.msra.mxu0 0
  %541 = vmatprep.subr.bf16.mxu0 0
  %542 = vmatpush2.bf16.msra.mxu0 0
  %543 = vmatprep.subr.bf16.mxu0 0
  %544 = vmatpush2.bf16.msra.mxu0 0
  %545 = vmatprep.mubr.bf16.mxu0 0
  %546 = vmatmul.mubr.bf16.gmra.mxu0 %v508
  %v547 = vpop.f32.mrf.mxu0
  %v548 = vadd.f32 %v469, %v547
  %v549 = vpop.f32.mrf.mxu0
  %v550 = vpop.f32.mrf.mxu0
  %v551 = vadd.f32 %v472, %v550
  %v552 = vpop.f32.mrf.mxu0
  %553 = vmatprep.mubr.bf16.mxu0 0
  %554 = vmatmul.mubr.bf16.gmra.mxu0 %v511
  %v555 = vpop.f32.mrf.mxu0
  %v556 = vadd.f32 %v477, %v555
  %v557 = vpop.f32.mrf.mxu0
  %v558 = vpop.f32.mrf.mxu0
  %v559 = vadd.f32 %v480, %v558
  %v560 = vpop.f32.mrf.mxu0
  %561 = vdwg.mxu0
  %v562 = vrot.slane %v357, 1
  %v563 = vrot.slane %v358, 1
  %v564 = vrot.slane %v359, 1
  %v565 = vrot.slane %v360, 1
  %vm566 = vcmp.lt.s32.totalorder %v28, 7
  %v567 = vsel %vm566, %v564, %v565
  %v568 = vsel %vm566, %v563, %v564
  %v569 = vsel %vm566, %v562, %v563
  %v570 = vsel %vm566, %v565, %v562
  %v571 = vsel %vm84, 1, 0
  %v572 = vsel %vm85, 1, 0
  %v573 = vsel %vm86, 1, 0
  %v574 = vsel %vm87, 1, 0
  %vm575 = vcmp.eq.s32.totalorder %v571, 1
  %vm576 = vcmp.eq.s32.totalorder %v572, 1
  %vm577 = vcmp.eq.s32.totalorder %v573, 1
  %vm578 = vcmp.eq.s32.totalorder %v574, 1
  %v579 = vsel %vm575, %v569, 0.0
  %v580 = vsel %vm576, %v568, 0.0
  %v581 = vsel %vm577, %v567, 0.0
  %v582 = vsel %vm578, %v570, 0.0
  %v583 = vpack.c.bf16 %v580, %v579
  %v584 = vpack.c.bf16 %v582, %v581
  %s585 = scalar_lea.vmem %s1, 64
  %v586 = vld [vmem:[%s585] sm:$0xf]
  %v587 = vld [vmem:[%s585 + $0x4] sm:$0xf]
  %v588 = vld [vmem:[%s585 + $0x8] sm:$0xf]
  %v589 = vld [vmem:[%s585 + $0xc] sm:$0xf]
  %v590 = vld [vmem:[%s585 + $0x10] sm:$0xf]
  %v591 = vld [vmem:[%s585 + $0x14] sm:$0xf]
  %v592 = vld [vmem:[%s585 + $0x18] sm:$0xf]
  %v593 = vld [vmem:[%s585 + $0x1c] sm:$0xf]
  %v602 = vunpack.c.l.b16 %v586
  %v603 = vunpack.c.l.b16 %v587
  %v604 = vunpack.c.l.b16 %v588
  %v605 = vunpack.c.l.b16 %v589
  %v606 = vunpack.c.l.b16 %v590
  %v607 = vunpack.c.l.b16 %v591
  %v608 = vunpack.c.l.b16 %v592
  %v609 = vunpack.c.l.b16 %v593
  %v610 = vpack.c.b16 %v603, %v602
  %v611 = vpack.c.b16 %v605, %v604
  %v612 = vpack.c.b16 %v607, %v606
  %v613 = vpack.c.b16 %v609, %v608
  %v619 = vsel %vm427, %v583, 0
  %v622 = vsel %vm427, %v584, 0
  %624 = vmatprep.subr.bf16.mxu0 0
  %625 = vmatpush1.bf16.msra.mxu0 0
  %626 = vmatprep.subr.bf16.mxu0 0
  %627 = vmatpush1.bf16.msra.mxu0 0
  %628 = vmatprep.subr.bf16.mxu0 0
  %629 = vmatpush1.bf16.msra.mxu0 0
  %630 = vmatprep.subr.bf16.mxu0 0
  %631 = vmatpush1.bf16.msra.mxu0 0
  %632 = vmatprep.subr.bf16.mxu0 0
  %633 = vmatpush1.bf16.msra.mxu0 %v613
  %634 = vmatprep.subr.bf16.mxu0 0
  %635 = vmatpush1.bf16.msra.mxu0 %v612
  %636 = vmatprep.subr.bf16.mxu0 0
  %637 = vmatpush1.bf16.msra.mxu0 %v611
  %638 = vmatprep.subr.bf16.mxu0 0
  %639 = vmatpush1.bf16.msra.mxu0 %v610
  %640 = vmatprep.subr.bf16.mxu0 0
  %641 = vmatpush2.bf16.msra.mxu0 0
  %642 = vmatprep.subr.bf16.mxu0 0
  %643 = vmatpush2.bf16.msra.mxu0 0
  %644 = vmatprep.subr.bf16.mxu0 0
  %645 = vmatpush2.bf16.msra.mxu0 0
  %646 = vmatprep.subr.bf16.mxu0 0
  %647 = vmatpush2.bf16.msra.mxu0 0
  %648 = vmatprep.subr.bf16.mxu0 0
  %649 = vmatpush2.bf16.msra.mxu0 0
  %650 = vmatprep.subr.bf16.mxu0 0
  %651 = vmatpush2.bf16.msra.mxu0 0
  %652 = vmatprep.subr.bf16.mxu0 0
  %653 = vmatpush2.bf16.msra.mxu0 0
  %654 = vmatprep.subr.bf16.mxu0 0
  %655 = vmatpush2.bf16.msra.mxu0 0
  %656 = vmatprep.mubr.bf16.mxu0 0
  %657 = vmatmul.mubr.bf16.gmra.mxu0 %v619
  %v658 = vpop.f32.mrf.mxu0
  %v659 = vadd.f32 0.0, %v658
  %v660 = vpop.f32.mrf.mxu0
  %v661 = vpop.f32.mrf.mxu0
  %v662 = vadd.f32 0.0, %v661
  %v663 = vpop.f32.mrf.mxu0
  %664 = vmatprep.mubr.bf16.mxu0 0
  %665 = vmatmul.mubr.bf16.gmra.mxu0 %v622
  %v666 = vpop.f32.mrf.mxu0
  %v667 = vadd.f32 0.0, %v666
  %v668 = vpop.f32.mrf.mxu0
  %v669 = vpop.f32.mrf.mxu0
  %v670 = vadd.f32 0.0, %v669
  %v671 = vpop.f32.mrf.mxu0
  %672 = vdwg.mxu0
  %v673 = vadd.f32 %v548, %v659
  %v674 = vadd.f32 %v551, %v662
  %v675 = vadd.f32 %v556, %v667
  %v676 = vadd.f32 %v559, %v670
  %v677 = vadd.f32 %v673, %v674
  %v678 = vadd.f32 %v677, %v675
  %v679 = vadd.f32 %v678, %v676
  %v680 = vrot.slane %v679, 4
  %v681 = vadd.f32 %v679, %v680
  %v682 = vrot.slane %v681, 2
  %v683 = vadd.f32 %v681, %v682
  %v684 = vrot.slane %v683, 1
  %v685 = vadd.f32 %v683, %v684
  %686 = vmatprep.subr.mxu0 0.0
  %687 = vmatpush1.msra.mxu0 %v341
  %688 = vmatprep.subr.mxu0 0.0
  %689 = vmatpush1.msra.mxu0 %v340
  %690 = vmatprep.subr.mxu0 0.0
  %691 = vmatpush1.msra.mxu0 %v339
  %692 = vmatprep.subr.mxu0 0.0
  %693 = vmatpush1.msra.mxu0 %v338
  %694 = vmatprep.subr.mxu0 0.0
  %695 = vmatpush1.msra.mxu0 %v337
  %696 = vmatprep.subr.mxu0 0.0
  %697 = vmatpush1.msra.mxu0 %v336
  %698 = vmatprep.subr.mxu0 0.0
  %699 = vmatpush1.msra.mxu0 %v335
  %700 = vmatprep.subr.mxu0 0.0
  %701 = vmatpush1.msra.mxu0 %v334
  %702 = vmatprep.subr.mxu0 0.0
  %703 = vmatpush1.msra.mxu0 %v333
  %704 = vmatprep.subr.mxu0 0.0
  %705 = vmatpush1.msra.mxu0 %v332
  %706 = vmatprep.subr.mxu0 0.0
  %707 = vmatpush1.msra.mxu0 %v331
  %708 = vmatprep.subr.mxu0 0.0
  %709 = vmatpush1.msra.mxu0 %v330
  %710 = vmatprep.subr.mxu0 0.0
  %711 = vmatpush1.msra.mxu0 %v329
  %712 = vmatprep.subr.mxu0 0.0
  %713 = vmatpush1.msra.mxu0 %v328
  %714 = vmatprep.subr.mxu0 0.0
  %715 = vmatpush1.msra.mxu0 %v327
  %716 = vmatprep.subr.mxu0 0.0
  %717 = vmatpush1.msra.mxu0 %v326
  %718 = vmatprep.subr.mxu0 0.0
  %719 = vmatpush2.msra.mxu0 0.0
  %720 = vmatprep.subr.mxu0 0.0
  %721 = vmatpush2.msra.mxu0 0.0
  %722 = vmatprep.subr.mxu0 0.0
  %723 = vmatpush2.msra.mxu0 0.0
  %724 = vmatprep.subr.mxu0 0.0
  %725 = vmatpush2.msra.mxu0 0.0
  %726 = vmatprep.subr.mxu0 0.0
  %727 = vmatpush2.msra.mxu0 0.0
  %728 = vmatprep.subr.mxu0 0.0
  %729 = vmatpush2.msra.mxu0 0.0
  %730 = vmatprep.subr.mxu0 0.0
  %731 = vmatpush2.msra.mxu0 0.0
  %732 = vmatprep.subr.mxu0 0.0
  %733 = vmatpush2.msra.mxu0 0.0
  %734 = vmatprep.subr.mxu0 0.0
  %735 = vmatpush2.msra.mxu0 0.0
  %736 = vmatprep.subr.mxu0 0.0
  %737 = vmatpush2.msra.mxu0 0.0
  %738 = vmatprep.subr.mxu0 0.0
  %739 = vmatpush2.msra.mxu0 0.0
  %740 = vmatprep.subr.mxu0 0.0
  %741 = vmatpush2.msra.mxu0 0.0
  %742 = vmatprep.subr.mxu0 0.0
  %743 = vmatpush2.msra.mxu0 0.0
  %744 = vmatprep.subr.mxu0 0.0
  %745 = vmatpush2.msra.mxu0 0.0
  %746 = vmatprep.subr.mxu0 0.0
  %747 = vmatpush2.msra.mxu0 0.0
  %748 = vmatprep.subr.mxu0 0.0
  %749 = vmatpush2.msra.mxu0 0.0
  %750 = vmatprep.mubr.f32.mxu0 0.0
  %751 = vmatmul.mubr.f32.gmra.mxu0 %v685
  %v752 = vpop.f32.mrf.mxu0
  %v753 = vadd.f32 0.0, %v752
  %v754 = vpop.f32.mrf.mxu0
  %755 = vdwg.mxu0
  %v756 = vmul.f32 %v673, %v673
  %v757 = vmul.f32 %v674, %v674
  %v758 = vmul.f32 %v675, %v675
  %v759 = vmul.f32 %v676, %v676
  %v760 = vadd.f32 %v756, %v757
  %v761 = vadd.f32 %v760, %v758
  %v762 = vadd.f32 %v761, %v759
  %v763 = vrot.slane %v762, 4
  %v764 = vadd.f32 %v762, %v763
  %v765 = vrot.slane %v764, 2
  %v766 = vadd.f32 %v764, %v765
  %v767 = vrot.slane %v766, 1
  %v768 = vadd.f32 %v766, %v767
  %769 = vmatprep.subr.mxu0 0.0
  %770 = vmatpush1.msra.mxu0 %v341
  %771 = vmatprep.subr.mxu0 0.0
  %772 = vmatpush1.msra.mxu0 %v340
  %773 = vmatprep.subr.mxu0 0.0
  %774 = vmatpush1.msra.mxu0 %v339
  %775 = vmatprep.subr.mxu0 0.0
  %776 = vmatpush1.msra.mxu0 %v338
  %777 = vmatprep.subr.mxu0 0.0
  %778 = vmatpush1.msra.mxu0 %v337
  %779 = vmatprep.subr.mxu0 0.0
  %780 = vmatpush1.msra.mxu0 %v336
  %781 = vmatprep.subr.mxu0 0.0
  %782 = vmatpush1.msra.mxu0 %v335
  %783 = vmatprep.subr.mxu0 0.0
  %784 = vmatpush1.msra.mxu0 %v334
  %785 = vmatprep.subr.mxu0 0.0
  %786 = vmatpush1.msra.mxu0 %v333
  %787 = vmatprep.subr.mxu0 0.0
  %788 = vmatpush1.msra.mxu0 %v332
  %789 = vmatprep.subr.mxu0 0.0
  %790 = vmatpush1.msra.mxu0 %v331
  %791 = vmatprep.subr.mxu0 0.0
  %792 = vmatpush1.msra.mxu0 %v330
  %793 = vmatprep.subr.mxu0 0.0
  %794 = vmatpush1.msra.mxu0 %v329
  %795 = vmatprep.subr.mxu0 0.0
  %796 = vmatpush1.msra.mxu0 %v328
  %797 = vmatprep.subr.mxu0 0.0
  %798 = vmatpush1.msra.mxu0 %v327
  %799 = vmatprep.subr.mxu0 0.0
  %800 = vmatpush1.msra.mxu0 %v326
  %801 = vmatprep.subr.mxu0 0.0
  %802 = vmatpush2.msra.mxu0 0.0
  %803 = vmatprep.subr.mxu0 0.0
  %804 = vmatpush2.msra.mxu0 0.0
  %805 = vmatprep.subr.mxu0 0.0
  %806 = vmatpush2.msra.mxu0 0.0
  %807 = vmatprep.subr.mxu0 0.0
  %808 = vmatpush2.msra.mxu0 0.0
  %809 = vmatprep.subr.mxu0 0.0
  %810 = vmatpush2.msra.mxu0 0.0
  %811 = vmatprep.subr.mxu0 0.0
  %812 = vmatpush2.msra.mxu0 0.0
  %813 = vmatprep.subr.mxu0 0.0
  %814 = vmatpush2.msra.mxu0 0.0
  %815 = vmatprep.subr.mxu0 0.0
  %816 = vmatpush2.msra.mxu0 0.0
  %817 = vmatprep.subr.mxu0 0.0
  %818 = vmatpush2.msra.mxu0 0.0
  %819 = vmatprep.subr.mxu0 0.0
  %820 = vmatpush2.msra.mxu0 0.0
  %821 = vmatprep.subr.mxu0 0.0
  %822 = vmatpush2.msra.mxu0 0.0
  %823 = vmatprep.subr.mxu0 0.0
  %824 = vmatpush2.msra.mxu0 0.0
  %825 = vmatprep.subr.mxu0 0.0
  %826 = vmatpush2.msra.mxu0 0.0
  %827 = vmatprep.subr.mxu0 0.0
  %828 = vmatpush2.msra.mxu0 0.0
  %829 = vmatprep.subr.mxu0 0.0
  %830 = vmatpush2.msra.mxu0 0.0
  %831 = vmatprep.subr.mxu0 0.0
  %832 = vmatpush2.msra.mxu0 0.0
  %833 = vmatprep.mubr.f32.mxu0 0.0
  %834 = vmatmul.mubr.f32.gmra.mxu0 %v768
  %v835 = vpop.f32.mrf.mxu0
  %v836 = vadd.f32 0.0, %v835
  %v837 = vpop.f32.mrf.mxu0
  %838 = vdwg.mxu0
  %v839 = vmul.f32 %v753, 0.001953125
  %v840 = vmul.f32 %v836, 0.001953125
  %v841 = vmul.f32 %v839, %v839
  %v842 = vsub.f32 %v840, %v841
  %v843 = vmax.f32 %v842, 0.0
  %v844 = vld [vmem:[%s3] sm:$0x1]
  %v845 = vadd.f32 %v843, 1e-05
  %v846 = vrsqrt.pop %v845
  %v847 = vmul.f32 %v844, %v846
  %v848 = vld [vmem:[%s4] sm:$0x1]
  %v849 = vmul.f32 %v839, %v847
  %v850 = vsub.f32 %v848, %v849
  %vm851 = vcmask 64512
  %v853 = vsel %vm851, %v847, 0
  %855 = vmatprep.subr.mxu0 0.0
  %856 = vmatpush1.msra.mxu0 0.0
  %857 = vmatprep.subr.mxu0 0.0
  %858 = vmatpush1.msra.mxu0 0.0
  %859 = vmatprep.subr.mxu0 0.0
  %860 = vmatpush1.msra.mxu0 0.0
  %861 = vmatprep.subr.mxu0 0.0
  %862 = vmatpush1.msra.mxu0 0.0
  %863 = vmatprep.subr.mxu0 0.0
  %864 = vmatpush1.msra.mxu0 0.0
  %865 = vmatprep.subr.mxu0 0.0
  %866 = vmatpush1.msra.mxu0 0.0
  %867 = vmatprep.subr.mxu0 0.0
  %868 = vmatpush1.msra.mxu0 0.0
  %869 = vmatprep.subr.mxu0 0.0
  %870 = vmatpush1.msra.mxu0 0.0
  %871 = vmatprep.subr.mxu0 0.0
  %872 = vmatpush1.msra.mxu0 0.0
  %873 = vmatprep.subr.mxu0 0.0
  %874 = vmatpush1.msra.mxu0 0.0
  %875 = vmatprep.subr.mxu0 0.0
  %876 = vmatpush1.msra.mxu0 0.0
  %877 = vmatprep.subr.mxu0 0.0
  %878 = vmatpush1.msra.mxu0 0.0
  %879 = vmatprep.subr.mxu0 0.0
  %880 = vmatpush1.msra.mxu0 0.0
  %881 = vmatprep.subr.mxu0 0.0
  %882 = vmatpush1.msra.mxu0 0.0
  %883 = vmatprep.subr.mxu0 0.0
  %884 = vmatpush1.msra.mxu0 0.0
  %885 = vmatprep.subr.mxu0 0.0
  %886 = vmatpush1.msra.mxu0 %v356
  %887 = vmatprep.subr.mxu0 0.0
  %888 = vmatpush2.msra.mxu0 0.0
  %889 = vmatprep.subr.mxu0 0.0
  %890 = vmatpush2.msra.mxu0 0.0
  %891 = vmatprep.subr.mxu0 0.0
  %892 = vmatpush2.msra.mxu0 0.0
  %893 = vmatprep.subr.mxu0 0.0
  %894 = vmatpush2.msra.mxu0 0.0
  %895 = vmatprep.subr.mxu0 0.0
  %896 = vmatpush2.msra.mxu0 0.0
  %897 = vmatprep.subr.mxu0 0.0
  %898 = vmatpush2.msra.mxu0 0.0
  %899 = vmatprep.subr.mxu0 0.0
  %900 = vmatpush2.msra.mxu0 0.0
  %901 = vmatprep.subr.mxu0 0.0
  %902 = vmatpush2.msra.mxu0 0.0
  %903 = vmatprep.subr.mxu0 0.0
  %904 = vmatpush2.msra.mxu0 0.0
  %905 = vmatprep.subr.mxu0 0.0
  %906 = vmatpush2.msra.mxu0 0.0
  %907 = vmatprep.subr.mxu0 0.0
  %908 = vmatpush2.msra.mxu0 0.0
  %909 = vmatprep.subr.mxu0 0.0
  %910 = vmatpush2.msra.mxu0 0.0
  %911 = vmatprep.subr.mxu0 0.0
  %912 = vmatpush2.msra.mxu0 0.0
  %913 = vmatprep.subr.mxu0 0.0
  %914 = vmatpush2.msra.mxu0 0.0
  %915 = vmatprep.subr.mxu0 0.0
  %916 = vmatpush2.msra.mxu0 0.0
  %917 = vmatprep.subr.mxu0 0.0
  %918 = vmatpush2.msra.mxu0 0.0
  %919 = vmatprep.mubr.f32.mxu0 0.0
  %920 = vmatmul.mubr.f32.gmra.mxu0 %v853
  %v921 = vpop.f32.mrf.mxu0
  %v922 = vadd.f32 0.0, %v921
  %v923 = vpop.f32.mrf.mxu0
  %924 = vdwg.mxu0
  %v926 = vsel %vm851, %v850, 0
  %928 = vmatprep.subr.mxu0 0.0
  %929 = vmatpush1.msra.mxu0 0.0
  %930 = vmatprep.subr.mxu0 0.0
  %931 = vmatpush1.msra.mxu0 0.0
  %932 = vmatprep.subr.mxu0 0.0
  %933 = vmatpush1.msra.mxu0 0.0
  %934 = vmatprep.subr.mxu0 0.0
  %935 = vmatpush1.msra.mxu0 0.0
  %936 = vmatprep.subr.mxu0 0.0
  %937 = vmatpush1.msra.mxu0 0.0
  %938 = vmatprep.subr.mxu0 0.0
  %939 = vmatpush1.msra.mxu0 0.0
  %940 = vmatprep.subr.mxu0 0.0
  %941 = vmatpush1.msra.mxu0 0.0
  %942 = vmatprep.subr.mxu0 0.0
  %943 = vmatpush1.msra.mxu0 0.0
  %944 = vmatprep.subr.mxu0 0.0
  %945 = vmatpush1.msra.mxu0 0.0
  %946 = vmatprep.subr.mxu0 0.0
  %947 = vmatpush1.msra.mxu0 0.0
  %948 = vmatprep.subr.mxu0 0.0
  %949 = vmatpush1.msra.mxu0 0.0
  %950 = vmatprep.subr.mxu0 0.0
  %951 = vmatpush1.msra.mxu0 0.0
  %952 = vmatprep.subr.mxu0 0.0
  %953 = vmatpush1.msra.mxu0 0.0
  %954 = vmatprep.subr.mxu0 0.0
  %955 = vmatpush1.msra.mxu0 0.0
  %956 = vmatprep.subr.mxu0 0.0
  %957 = vmatpush1.msra.mxu0 0.0
  %958 = vmatprep.subr.mxu0 0.0
  %959 = vmatpush1.msra.mxu0 %v356
  %960 = vmatprep.subr.mxu0 0.0
  %961 = vmatpush2.msra.mxu0 0.0
  %962 = vmatprep.subr.mxu0 0.0
  %963 = vmatpush2.msra.mxu0 0.0
  %964 = vmatprep.subr.mxu0 0.0
  %965 = vmatpush2.msra.mxu0 0.0
  %966 = vmatprep.subr.mxu0 0.0
  %967 = vmatpush2.msra.mxu0 0.0
  %968 = vmatprep.subr.mxu0 0.0
  %969 = vmatpush2.msra.mxu0 0.0
  %970 = vmatprep.subr.mxu0 0.0
  %971 = vmatpush2.msra.mxu0 0.0
  %972 = vmatprep.subr.mxu0 0.0
  %973 = vmatpush2.msra.mxu0 0.0
  %974 = vmatprep.subr.mxu0 0.0
  %975 = vmatpush2.msra.mxu0 0.0
  %976 = vmatprep.subr.mxu0 0.0
  %977 = vmatpush2.msra.mxu0 0.0
  %978 = vmatprep.subr.mxu0 0.0
  %979 = vmatpush2.msra.mxu0 0.0
  %980 = vmatprep.subr.mxu0 0.0
  %981 = vmatpush2.msra.mxu0 0.0
  %982 = vmatprep.subr.mxu0 0.0
  %983 = vmatpush2.msra.mxu0 0.0
  %984 = vmatprep.subr.mxu0 0.0
  %985 = vmatpush2.msra.mxu0 0.0
  %986 = vmatprep.subr.mxu0 0.0
  %987 = vmatpush2.msra.mxu0 0.0
  %988 = vmatprep.subr.mxu0 0.0
  %989 = vmatpush2.msra.mxu0 0.0
  %990 = vmatprep.subr.mxu0 0.0
  %991 = vmatpush2.msra.mxu0 0.0
  %992 = vmatprep.mubr.f32.mxu0 0.0
  %993 = vmatmul.mubr.f32.gmra.mxu0 %v926
  %v994 = vpop.f32.mrf.mxu0
  %v995 = vadd.f32 0.0, %v994
  %v996 = vpop.f32.mrf.mxu0
  %997 = vdwg.mxu0
  %v998 = vlaneseq
  %v999 = vshrl.u32 %v998, 7
  %v1000 = vsub.s32 0, %v999
  %v1001 = vrot.slane %v922, %v1000
  %v1002 = vmul.f32 %v673, %v1001
  %v1003 = vmul.f32 %v674, %v1001
  %v1004 = vmul.f32 %v675, %v1001
  %v1005 = vmul.f32 %v676, %v1001
  %v1006 = vlaneseq
  %v1007 = vshrl.u32 %v1006, 7
  %v1008 = vsub.s32 0, %v1007
  %v1009 = vrot.slane %v995, %v1008
  %v1010 = vadd.f32 %v1002, %v1009
  %v1011 = vadd.f32 %v1003, %v1009
  %v1012 = vadd.f32 %v1004, %v1009
  %v1013 = vadd.f32 %v1005, %v1009
  %v1014 = vmax.f32 %v1010, 0.0
  %v1015 = vmax.f32 %v1011, 0.0
  %v1016 = vmax.f32 %v1012, 0.0
  %v1017 = vmax.f32 %v1013, 0.0
  %v1018 = vrot.slane %v1014, 7
  %v1019 = vrot.slane %v1015, 7
  %v1020 = vrot.slane %v1016, 7
  %v1021 = vrot.slane %v1017, 7
  %v1022 = vsel %vm365, %v1020, %v1021
  %v1023 = vsel %vm365, %v1019, %v1020
  %v1024 = vsel %vm365, %v1018, %v1019
  %v1025 = vsel %vm365, %v1021, %v1018
  %v1026 = vsel %vm374, %v1025, 0.0
  %v1027 = vsel %vm375, %v1024, 0.0
  %v1028 = vsel %vm376, %v1023, 0.0
  %v1029 = vsel %vm377, %v1022, 0.0
  %v1030 = vpack.c.bf16 %v1027, %v1026
  %v1031 = vpack.c.bf16 %v1029, %v1028
  %v1032 = vld [vmem:[%s2] sm:$0xf]
  %v1033 = vld [vmem:[%s2 + $0x4] sm:$0xf]
  %v1034 = vld [vmem:[%s2 + $0x8] sm:$0xf]
  %v1035 = vld [vmem:[%s2 + $0xc] sm:$0xf]
  %v1036 = vld [vmem:[%s2 + $0x10] sm:$0xf]
  %v1037 = vld [vmem:[%s2 + $0x14] sm:$0xf]
  %v1038 = vld [vmem:[%s2 + $0x18] sm:$0xf]
  %v1039 = vld [vmem:[%s2 + $0x1c] sm:$0xf]
  %v1040 = vld [vmem:[%s2 + $0x20] sm:$0xf]
  %v1041 = vld [vmem:[%s2 + $0x24] sm:$0xf]
  %v1042 = vld [vmem:[%s2 + $0x28] sm:$0xf]
  %v1043 = vld [vmem:[%s2 + $0x2c] sm:$0xf]
  %v1044 = vld [vmem:[%s2 + $0x30] sm:$0xf]
  %v1045 = vld [vmem:[%s2 + $0x34] sm:$0xf]
  %v1046 = vld [vmem:[%s2 + $0x38] sm:$0xf]
  %v1047 = vld [vmem:[%s2 + $0x3c] sm:$0xf]
  %v1048 = vpack.c.bf16 %v1015, %v1014
  %v1049 = vpack.c.bf16 %v1017, %v1016
  %s1050 = scalar_lea.vmem %s2, 64
  %v1051 = vld [vmem:[%s1050] sm:$0xf]
  %v1052 = vld [vmem:[%s1050 + $0x4] sm:$0xf]
  %v1053 = vld [vmem:[%s1050 + $0x8] sm:$0xf]
  %v1054 = vld [vmem:[%s1050 + $0xc] sm:$0xf]
  %v1055 = vld [vmem:[%s1050 + $0x10] sm:$0xf]
  %v1056 = vld [vmem:[%s1050 + $0x14] sm:$0xf]
  %v1057 = vld [vmem:[%s1050 + $0x18] sm:$0xf]
  %v1058 = vld [vmem:[%s1050 + $0x1c] sm:$0xf]
  %v1059 = vld [vmem:[%s1050 + $0x20] sm:$0xf]
  %v1060 = vld [vmem:[%s1050 + $0x24] sm:$0xf]
  %v1061 = vld [vmem:[%s1050 + $0x28] sm:$0xf]
  %v1062 = vld [vmem:[%s1050 + $0x2c] sm:$0xf]
  %v1063 = vld [vmem:[%s1050 + $0x30] sm:$0xf]
  %v1064 = vld [vmem:[%s1050 + $0x34] sm:$0xf]
  %v1065 = vld [vmem:[%s1050 + $0x38] sm:$0xf]
  %v1066 = vld [vmem:[%s1050 + $0x3c] sm:$0xf]
  %v1083 = vunpack.c.l.b16 %v1051
  %v1084 = vunpack.c.l.b16 %v1052
  %v1085 = vunpack.c.l.b16 %v1053
  %v1086 = vunpack.c.l.b16 %v1054
  %v1087 = vunpack.c.l.b16 %v1055
  %v1088 = vunpack.c.l.b16 %v1056
  %v1089 = vunpack.c.l.b16 %v1057
  %v1090 = vunpack.c.l.b16 %v1058
  %v1091 = vunpack.c.l.b16 %v1059
  %v1092 = vunpack.c.l.b16 %v1060
  %v1093 = vunpack.c.l.b16 %v1061
  %v1094 = vunpack.c.l.b16 %v1062
  %v1095 = vunpack.c.l.b16 %v1063
  %v1096 = vunpack.c.l.b16 %v1064
  %v1097 = vunpack.c.l.b16 %v1065
  %v1098 = vunpack.c.l.b16 %v1066
  %v1099 = vpack.c.b16 %v1084, %v1083
  %v1100 = vpack.c.b16 %v1086, %v1085
  %v1101 = vpack.c.b16 %v1088, %v1087
  %v1102 = vpack.c.b16 %v1090, %v1089
  %v1103 = vpack.c.b16 %v1092, %v1091
  %v1104 = vpack.c.b16 %v1094, %v1093
  %v1105 = vpack.c.b16 %v1096, %v1095
  %v1106 = vpack.c.b16 %v1098, %v1097
  %1115 = vmatprep.subr.bf16.mxu0 0
  %1116 = vmatpush1.bf16.msra.mxu0 %v1106
  %1117 = vmatprep.subr.bf16.mxu0 0
  %1118 = vmatpush1.bf16.msra.mxu0 %v1105
  %1119 = vmatprep.subr.bf16.mxu0 0
  %1120 = vmatpush1.bf16.msra.mxu0 %v1104
  %1121 = vmatprep.subr.bf16.mxu0 0
  %1122 = vmatpush1.bf16.msra.mxu0 %v1103
  %1123 = vmatprep.subr.bf16.mxu0 0
  %1124 = vmatpush1.bf16.msra.mxu0 %v1102
  %1125 = vmatprep.subr.bf16.mxu0 0
  %1126 = vmatpush1.bf16.msra.mxu0 %v1101
  %1127 = vmatprep.subr.bf16.mxu0 0
  %1128 = vmatpush1.bf16.msra.mxu0 %v1100
  %1129 = vmatprep.subr.bf16.mxu0 0
  %1130 = vmatpush1.bf16.msra.mxu0 %v1099
  %1131 = vmatprep.subr.bf16.mxu0 0
  %1132 = vmatpush2.bf16.msra.mxu0 0
  %1133 = vmatprep.subr.bf16.mxu0 0
  %1134 = vmatpush2.bf16.msra.mxu0 0
  %1135 = vmatprep.subr.bf16.mxu0 0
  %1136 = vmatpush2.bf16.msra.mxu0 0
  %1137 = vmatprep.subr.bf16.mxu0 0
  %1138 = vmatpush2.bf16.msra.mxu0 0
  %1139 = vmatprep.subr.bf16.mxu0 0
  %1140 = vmatpush2.bf16.msra.mxu0 0
  %1141 = vmatprep.subr.bf16.mxu0 0
  %1142 = vmatpush2.bf16.msra.mxu0 0
  %1143 = vmatprep.subr.bf16.mxu0 0
  %1144 = vmatpush2.bf16.msra.mxu0 0
  %1145 = vmatprep.subr.bf16.mxu0 0
  %1146 = vmatpush2.bf16.msra.mxu0 0
  %1147 = vmatprep.mubr.bf16.mxu0 0
  %1148 = vmatmul.mubr.bf16.gmra.mxu0 %v1048
  %v1149 = vpop.f32.mrf.mxu0
  %v1150 = vadd.f32 0.0, %v1149
  %v1151 = vpop.f32.mrf.mxu0
  %v1152 = vpop.f32.mrf.mxu0
  %v1153 = vadd.f32 0.0, %v1152
  %v1154 = vpop.f32.mrf.mxu0
  %1155 = vmatprep.mubr.bf16.mxu0 0
  %1156 = vmatmul.mubr.bf16.gmra.mxu0 %v1049
  %v1157 = vpop.f32.mrf.mxu0
  %v1158 = vadd.f32 0.0, %v1157
  %v1159 = vpop.f32.mrf.mxu0
  %v1160 = vpop.f32.mrf.mxu0
  %v1161 = vadd.f32 0.0, %v1160
  %v1162 = vpop.f32.mrf.mxu0
  %1163 = vdwg.mxu0
  %v1180 = vunpack.c.l.b16 %v1032
  %v1181 = vunpack.c.l.b16 %v1033
  %v1182 = vunpack.c.l.b16 %v1034
  %v1183 = vunpack.c.l.b16 %v1035
  %v1184 = vunpack.c.l.b16 %v1036
  %v1185 = vunpack.c.l.b16 %v1037
  %v1186 = vunpack.c.l.b16 %v1038
  %v1187 = vunpack.c.l.b16 %v1039
  %v1188 = vunpack.c.l.b16 %v1040
  %v1189 = vunpack.c.l.b16 %v1041
  %v1190 = vunpack.c.l.b16 %v1042
  %v1191 = vunpack.c.l.b16 %v1043
  %v1192 = vunpack.c.l.b16 %v1044
  %v1193 = vunpack.c.l.b16 %v1045
  %v1194 = vunpack.c.l.b16 %v1046
  %v1195 = vunpack.c.l.b16 %v1047
  %v1196 = vpack.c.b16 %v1181, %v1180
  %v1197 = vpack.c.b16 %v1183, %v1182
  %v1198 = vpack.c.b16 %v1185, %v1184
  %v1199 = vpack.c.b16 %v1187, %v1186
  %v1200 = vpack.c.b16 %v1189, %v1188
  %v1201 = vpack.c.b16 %v1191, %v1190
  %v1202 = vpack.c.b16 %v1193, %v1192
  %v1203 = vpack.c.b16 %v1195, %v1194
  %1212 = vmatprep.subr.bf16.mxu0 0
  %1213 = vmatpush1.bf16.msra.mxu0 %v1203
  %1214 = vmatprep.subr.bf16.mxu0 0
  %1215 = vmatpush1.bf16.msra.mxu0 %v1202
  %1216 = vmatprep.subr.bf16.mxu0 0
  %1217 = vmatpush1.bf16.msra.mxu0 %v1201
  %1218 = vmatprep.subr.bf16.mxu0 0
  %1219 = vmatpush1.bf16.msra.mxu0 %v1200
  %1220 = vmatprep.subr.bf16.mxu0 0
  %1221 = vmatpush1.bf16.msra.mxu0 %v1199
  %1222 = vmatprep.subr.bf16.mxu0 0
  %1223 = vmatpush1.bf16.msra.mxu0 %v1198
  %1224 = vmatprep.subr.bf16.mxu0 0
  %1225 = vmatpush1.bf16.msra.mxu0 %v1197
  %1226 = vmatprep.subr.bf16.mxu0 0
  %1227 = vmatpush1.bf16.msra.mxu0 %v1196
  %1228 = vmatprep.subr.bf16.mxu0 0
  %1229 = vmatpush2.bf16.msra.mxu0 0
  %1230 = vmatprep.subr.bf16.mxu0 0
  %1231 = vmatpush2.bf16.msra.mxu0 0
  %1232 = vmatprep.subr.bf16.mxu0 0
  %1233 = vmatpush2.bf16.msra.mxu0 0
  %1234 = vmatprep.subr.bf16.mxu0 0
  %1235 = vmatpush2.bf16.msra.mxu0 0
  %1236 = vmatprep.subr.bf16.mxu0 0
  %1237 = vmatpush2.bf16.msra.mxu0 0
  %1238 = vmatprep.subr.bf16.mxu0 0
  %1239 = vmatpush2.bf16.msra.mxu0 0
  %1240 = vmatprep.subr.bf16.mxu0 0
  %1241 = vmatpush2.bf16.msra.mxu0 0
  %1242 = vmatprep.subr.bf16.mxu0 0
  %1243 = vmatpush2.bf16.msra.mxu0 0
  %1244 = vmatprep.mubr.bf16.mxu0 0
  %1245 = vmatmul.mubr.bf16.gmra.mxu0 %v1030
  %v1246 = vpop.f32.mrf.mxu0
  %v1247 = vadd.f32 %v1150, %v1246
  %v1248 = vpop.f32.mrf.mxu0
  %v1249 = vpop.f32.mrf.mxu0
  %v1250 = vadd.f32 %v1153, %v1249
  %v1251 = vpop.f32.mrf.mxu0
  %1252 = vmatprep.mubr.bf16.mxu0 0
  %1253 = vmatmul.mubr.bf16.gmra.mxu0 %v1031
  %v1254 = vpop.f32.mrf.mxu0
  %v1255 = vadd.f32 %v1158, %v1254
  %v1256 = vpop.f32.mrf.mxu0
  %v1257 = vpop.f32.mrf.mxu0
  %v1258 = vadd.f32 %v1161, %v1257
  %v1259 = vpop.f32.mrf.mxu0
  %1260 = vdwg.mxu0
  %v1261 = vrot.slane %v1014, 1
  %v1262 = vrot.slane %v1015, 1
  %v1263 = vrot.slane %v1016, 1
  %v1264 = vrot.slane %v1017, 1
  %v1265 = vsel %vm566, %v1263, %v1264
  %v1266 = vsel %vm566, %v1262, %v1263
  %v1267 = vsel %vm566, %v1261, %v1262
  %v1268 = vsel %vm566, %v1264, %v1261
  %v1269 = vsel %vm575, %v1267, 0.0
  %v1270 = vsel %vm576, %v1266, 0.0
  %v1271 = vsel %vm577, %v1265, 0.0
  %v1272 = vsel %vm578, %v1268, 0.0
  %v1273 = vpack.c.bf16 %v1270, %v1269
  %v1274 = vpack.c.bf16 %v1272, %v1271
  %s1275 = scalar_lea.vmem %s2, 128
  %v1276 = vld [vmem:[%s1275] sm:$0xf]
  %v1277 = vld [vmem:[%s1275 + $0x4] sm:$0xf]
  %v1278 = vld [vmem:[%s1275 + $0x8] sm:$0xf]
  %v1279 = vld [vmem:[%s1275 + $0xc] sm:$0xf]
  %v1280 = vld [vmem:[%s1275 + $0x10] sm:$0xf]
  %v1281 = vld [vmem:[%s1275 + $0x14] sm:$0xf]
  %v1282 = vld [vmem:[%s1275 + $0x18] sm:$0xf]
  %v1283 = vld [vmem:[%s1275 + $0x1c] sm:$0xf]
  %v1284 = vld [vmem:[%s1275 + $0x20] sm:$0xf]
  %v1285 = vld [vmem:[%s1275 + $0x24] sm:$0xf]
  %v1286 = vld [vmem:[%s1275 + $0x28] sm:$0xf]
  %v1287 = vld [vmem:[%s1275 + $0x2c] sm:$0xf]
  %v1288 = vld [vmem:[%s1275 + $0x30] sm:$0xf]
  %v1289 = vld [vmem:[%s1275 + $0x34] sm:$0xf]
  %v1290 = vld [vmem:[%s1275 + $0x38] sm:$0xf]
  %v1291 = vld [vmem:[%s1275 + $0x3c] sm:$0xf]
  %v1308 = vunpack.c.l.b16 %v1276
  %v1309 = vunpack.c.l.b16 %v1277
  %v1310 = vunpack.c.l.b16 %v1278
  %v1311 = vunpack.c.l.b16 %v1279
  %v1312 = vunpack.c.l.b16 %v1280
  %v1313 = vunpack.c.l.b16 %v1281
  %v1314 = vunpack.c.l.b16 %v1282
  %v1315 = vunpack.c.l.b16 %v1283
  %v1316 = vunpack.c.l.b16 %v1284
  %v1317 = vunpack.c.l.b16 %v1285
  %v1318 = vunpack.c.l.b16 %v1286
  %v1319 = vunpack.c.l.b16 %v1287
  %v1320 = vunpack.c.l.b16 %v1288
  %v1321 = vunpack.c.l.b16 %v1289
  %v1322 = vunpack.c.l.b16 %v1290
  %v1323 = vunpack.c.l.b16 %v1291
  %v1324 = vpack.c.b16 %v1309, %v1308
  %v1325 = vpack.c.b16 %v1311, %v1310
  %v1326 = vpack.c.b16 %v1313, %v1312
  %v1327 = vpack.c.b16 %v1315, %v1314
  %v1328 = vpack.c.b16 %v1317, %v1316
  %v1329 = vpack.c.b16 %v1319, %v1318
  %v1330 = vpack.c.b16 %v1321, %v1320
  %v1331 = vpack.c.b16 %v1323, %v1322
  %1340 = vmatprep.subr.bf16.mxu0 0
  %1341 = vmatpush1.bf16.msra.mxu0 %v1331
  %1342 = vmatprep.subr.bf16.mxu0 0
  %1343 = vmatpush1.bf16.msra.mxu0 %v1330
  %1344 = vmatprep.subr.bf16.mxu0 0
  %1345 = vmatpush1.bf16.msra.mxu0 %v1329
  %1346 = vmatprep.subr.bf16.mxu0 0
  %1347 = vmatpush1.bf16.msra.mxu0 %v1328
  %1348 = vmatprep.subr.bf16.mxu0 0
  %1349 = vmatpush1.bf16.msra.mxu0 %v1327
  %1350 = vmatprep.subr.bf16.mxu0 0
  %1351 = vmatpush1.bf16.msra.mxu0 %v1326
  %1352 = vmatprep.subr.bf16.mxu0 0
  %1353 = vmatpush1.bf16.msra.mxu0 %v1325
  %1354 = vmatprep.subr.bf16.mxu0 0
  %1355 = vmatpush1.bf16.msra.mxu0 %v1324
  %1356 = vmatprep.subr.bf16.mxu0 0
  %1357 = vmatpush2.bf16.msra.mxu0 0
  %1358 = vmatprep.subr.bf16.mxu0 0
  %1359 = vmatpush2.bf16.msra.mxu0 0
  %1360 = vmatprep.subr.bf16.mxu0 0
  %1361 = vmatpush2.bf16.msra.mxu0 0
  %1362 = vmatprep.subr.bf16.mxu0 0
  %1363 = vmatpush2.bf16.msra.mxu0 0
  %1364 = vmatprep.subr.bf16.mxu0 0
  %1365 = vmatpush2.bf16.msra.mxu0 0
  %1366 = vmatprep.subr.bf16.mxu0 0
  %1367 = vmatpush2.bf16.msra.mxu0 0
  %1368 = vmatprep.subr.bf16.mxu0 0
  %1369 = vmatpush2.bf16.msra.mxu0 0
  %1370 = vmatprep.subr.bf16.mxu0 0
  %1371 = vmatpush2.bf16.msra.mxu0 0
  %1372 = vmatprep.mubr.bf16.mxu0 0
  %1373 = vmatmul.mubr.bf16.gmra.mxu0 %v1273
  %v1374 = vpop.f32.mrf.mxu0
  %v1375 = vadd.f32 0.0, %v1374
  %v1376 = vpop.f32.mrf.mxu0
  %v1377 = vpop.f32.mrf.mxu0
  %v1378 = vadd.f32 0.0, %v1377
  %v1379 = vpop.f32.mrf.mxu0
  %1380 = vmatprep.mubr.bf16.mxu0 0
  %1381 = vmatmul.mubr.bf16.gmra.mxu0 %v1274
  %v1382 = vpop.f32.mrf.mxu0
  %v1383 = vadd.f32 0.0, %v1382
  %v1384 = vpop.f32.mrf.mxu0
  %v1385 = vpop.f32.mrf.mxu0
  %v1386 = vadd.f32 0.0, %v1385
  %v1387 = vpop.f32.mrf.mxu0
  %1388 = vdwg.mxu0
  %v1389 = vadd.f32 %v1247, %v1375
  %v1390 = vadd.f32 %v1250, %v1378
  %v1391 = vadd.f32 %v1255, %v1383
  %v1392 = vadd.f32 %v1258, %v1386
  %v1393 = vadd.f32 %v1389, %v1390
  %v1394 = vadd.f32 %v1393, %v1391
  %v1395 = vadd.f32 %v1394, %v1392
  %v1396 = vrot.slane %v1395, 4
  %v1397 = vadd.f32 %v1395, %v1396
  %v1398 = vrot.slane %v1397, 2
  %v1399 = vadd.f32 %v1397, %v1398
  %v1400 = vrot.slane %v1399, 1
  %v1401 = vadd.f32 %v1399, %v1400
  %1402 = vmatprep.subr.mxu0 0.0
  %1403 = vmatpush1.msra.mxu0 %v341
  %1404 = vmatprep.subr.mxu0 0.0
  %1405 = vmatpush1.msra.mxu0 %v340
  %1406 = vmatprep.subr.mxu0 0.0
  %1407 = vmatpush1.msra.mxu0 %v339
  %1408 = vmatprep.subr.mxu0 0.0
  %1409 = vmatpush1.msra.mxu0 %v338
  %1410 = vmatprep.subr.mxu0 0.0
  %1411 = vmatpush1.msra.mxu0 %v337
  %1412 = vmatprep.subr.mxu0 0.0
  %1413 = vmatpush1.msra.mxu0 %v336
  %1414 = vmatprep.subr.mxu0 0.0
  %1415 = vmatpush1.msra.mxu0 %v335
  %1416 = vmatprep.subr.mxu0 0.0
  %1417 = vmatpush1.msra.mxu0 %v334
  %1418 = vmatprep.subr.mxu0 0.0
  %1419 = vmatpush1.msra.mxu0 %v333
  %1420 = vmatprep.subr.mxu0 0.0
  %1421 = vmatpush1.msra.mxu0 %v332
  %1422 = vmatprep.subr.mxu0 0.0
  %1423 = vmatpush1.msra.mxu0 %v331
  %1424 = vmatprep.subr.mxu0 0.0
  %1425 = vmatpush1.msra.mxu0 %v330
  %1426 = vmatprep.subr.mxu0 0.0
  %1427 = vmatpush1.msra.mxu0 %v329
  %1428 = vmatprep.subr.mxu0 0.0
  %1429 = vmatpush1.msra.mxu0 %v328
  %1430 = vmatprep.subr.mxu0 0.0
  %1431 = vmatpush1.msra.mxu0 %v327
  %1432 = vmatprep.subr.mxu0 0.0
  %1433 = vmatpush1.msra.mxu0 %v326
  %1434 = vmatprep.subr.mxu0 0.0
  %1435 = vmatpush2.msra.mxu0 0.0
  %1436 = vmatprep.subr.mxu0 0.0
  %1437 = vmatpush2.msra.mxu0 0.0
  %1438 = vmatprep.subr.mxu0 0.0
  %1439 = vmatpush2.msra.mxu0 0.0
  %1440 = vmatprep.subr.mxu0 0.0
  %1441 = vmatpush2.msra.mxu0 0.0
  %1442 = vmatprep.subr.mxu0 0.0
  %1443 = vmatpush2.msra.mxu0 0.0
  %1444 = vmatprep.subr.mxu0 0.0
  %1445 = vmatpush2.msra.mxu0 0.0
  %1446 = vmatprep.subr.mxu0 0.0
  %1447 = vmatpush2.msra.mxu0 0.0
  %1448 = vmatprep.subr.mxu0 0.0
  %1449 = vmatpush2.msra.mxu0 0.0
  %1450 = vmatprep.subr.mxu0 0.0
  %1451 = vmatpush2.msra.mxu0 0.0
  %1452 = vmatprep.subr.mxu0 0.0
  %1453 = vmatpush2.msra.mxu0 0.0
  %1454 = vmatprep.subr.mxu0 0.0
  %1455 = vmatpush2.msra.mxu0 0.0
  %1456 = vmatprep.subr.mxu0 0.0
  %1457 = vmatpush2.msra.mxu0 0.0
  %1458 = vmatprep.subr.mxu0 0.0
  %1459 = vmatpush2.msra.mxu0 0.0
  %1460 = vmatprep.subr.mxu0 0.0
  %1461 = vmatpush2.msra.mxu0 0.0
  %1462 = vmatprep.subr.mxu0 0.0
  %1463 = vmatpush2.msra.mxu0 0.0
  %1464 = vmatprep.subr.mxu0 0.0
  %1465 = vmatpush2.msra.mxu0 0.0
  %1466 = vmatprep.mubr.f32.mxu0 0.0
  %1467 = vmatmul.mubr.f32.gmra.mxu0 %v1401
  %v1468 = vpop.f32.mrf.mxu0
  %v1469 = vadd.f32 0.0, %v1468
  %v1470 = vpop.f32.mrf.mxu0
  %1471 = vdwg.mxu0
  %v1472 = vmul.f32 %v1389, %v1389
  %v1473 = vmul.f32 %v1390, %v1390
  %v1474 = vmul.f32 %v1391, %v1391
  %v1475 = vmul.f32 %v1392, %v1392
  %v1476 = vadd.f32 %v1472, %v1473
  %v1477 = vadd.f32 %v1476, %v1474
  %v1478 = vadd.f32 %v1477, %v1475
  %v1479 = vrot.slane %v1478, 4
  %v1480 = vadd.f32 %v1478, %v1479
  %v1481 = vrot.slane %v1480, 2
  %v1482 = vadd.f32 %v1480, %v1481
  %v1483 = vrot.slane %v1482, 1
  %v1484 = vadd.f32 %v1482, %v1483
  %1485 = vmatprep.subr.mxu0 0.0
  %1486 = vmatpush1.msra.mxu0 %v341
  %1487 = vmatprep.subr.mxu0 0.0
  %1488 = vmatpush1.msra.mxu0 %v340
  %1489 = vmatprep.subr.mxu0 0.0
  %1490 = vmatpush1.msra.mxu0 %v339
  %1491 = vmatprep.subr.mxu0 0.0
  %1492 = vmatpush1.msra.mxu0 %v338
  %1493 = vmatprep.subr.mxu0 0.0
  %1494 = vmatpush1.msra.mxu0 %v337
  %1495 = vmatprep.subr.mxu0 0.0
  %1496 = vmatpush1.msra.mxu0 %v336
  %1497 = vmatprep.subr.mxu0 0.0
  %1498 = vmatpush1.msra.mxu0 %v335
  %1499 = vmatprep.subr.mxu0 0.0
  %1500 = vmatpush1.msra.mxu0 %v334
  %1501 = vmatprep.subr.mxu0 0.0
  %1502 = vmatpush1.msra.mxu0 %v333
  %1503 = vmatprep.subr.mxu0 0.0
  %1504 = vmatpush1.msra.mxu0 %v332
  %1505 = vmatprep.subr.mxu0 0.0
  %1506 = vmatpush1.msra.mxu0 %v331
  %1507 = vmatprep.subr.mxu0 0.0
  %1508 = vmatpush1.msra.mxu0 %v330
  %1509 = vmatprep.subr.mxu0 0.0
  %1510 = vmatpush1.msra.mxu0 %v329
  %1511 = vmatprep.subr.mxu0 0.0
  %1512 = vmatpush1.msra.mxu0 %v328
  %1513 = vmatprep.subr.mxu0 0.0
  %1514 = vmatpush1.msra.mxu0 %v327
  %1515 = vmatprep.subr.mxu0 0.0
  %1516 = vmatpush1.msra.mxu0 %v326
  %1517 = vmatprep.subr.mxu0 0.0
  %1518 = vmatpush2.msra.mxu0 0.0
  %1519 = vmatprep.subr.mxu0 0.0
  %1520 = vmatpush2.msra.mxu0 0.0
  %1521 = vmatprep.subr.mxu0 0.0
  %1522 = vmatpush2.msra.mxu0 0.0
  %1523 = vmatprep.subr.mxu0 0.0
  %1524 = vmatpush2.msra.mxu0 0.0
  %1525 = vmatprep.subr.mxu0 0.0
  %1526 = vmatpush2.msra.mxu0 0.0
  %1527 = vmatprep.subr.mxu0 0.0
  %1528 = vmatpush2.msra.mxu0 0.0
  %1529 = vmatprep.subr.mxu0 0.0
  %1530 = vmatpush2.msra.mxu0 0.0
  %1531 = vmatprep.subr.mxu0 0.0
  %1532 = vmatpush2.msra.mxu0 0.0
  %1533 = vmatprep.subr.mxu0 0.0
  %1534 = vmatpush2.msra.mxu0 0.0
  %1535 = vmatprep.subr.mxu0 0.0
  %1536 = vmatpush2.msra.mxu0 0.0
  %1537 = vmatprep.subr.mxu0 0.0
  %1538 = vmatpush2.msra.mxu0 0.0
  %1539 = vmatprep.subr.mxu0 0.0
  %1540 = vmatpush2.msra.mxu0 0.0
  %1541 = vmatprep.subr.mxu0 0.0
  %1542 = vmatpush2.msra.mxu0 0.0
  %1543 = vmatprep.subr.mxu0 0.0
  %1544 = vmatpush2.msra.mxu0 0.0
  %1545 = vmatprep.subr.mxu0 0.0
  %1546 = vmatpush2.msra.mxu0 0.0
  %1547 = vmatprep.subr.mxu0 0.0
  %1548 = vmatpush2.msra.mxu0 0.0
  %1549 = vmatprep.mubr.f32.mxu0 0.0
  %1550 = vmatmul.mubr.f32.gmra.mxu0 %v1484
  %v1551 = vpop.f32.mrf.mxu0
  %v1552 = vadd.f32 0.0, %v1551
  %v1553 = vpop.f32.mrf.mxu0
  %1554 = vdwg.mxu0
  %v1555 = vmul.f32 %v1469, 0.001953125
  %v1556 = vmul.f32 %v1552, 0.001953125
  %v1557 = vmul.f32 %v1555, %v1555
  %v1558 = vsub.f32 %v1556, %v1557
  %v1559 = vmax.f32 %v1558, 0.0
  %v1560 = vld [vmem:[%s5] sm:$0x1]
  %v1561 = vadd.f32 %v1559, 1e-05
  %v1562 = vrsqrt.pop %v1561
  %v1563 = vmul.f32 %v1560, %v1562
  %v1564 = vld [vmem:[%s6] sm:$0x1]
  %v1565 = vmul.f32 %v1555, %v1563
  %v1566 = vsub.f32 %v1564, %v1565
  %v1568 = vsel %vm851, %v1563, 0
  %1570 = vmatprep.subr.mxu0 0.0
  %1571 = vmatpush1.msra.mxu0 0.0
  %1572 = vmatprep.subr.mxu0 0.0
  %1573 = vmatpush1.msra.mxu0 0.0
  %1574 = vmatprep.subr.mxu0 0.0
  %1575 = vmatpush1.msra.mxu0 0.0
  %1576 = vmatprep.subr.mxu0 0.0
  %1577 = vmatpush1.msra.mxu0 0.0
  %1578 = vmatprep.subr.mxu0 0.0
  %1579 = vmatpush1.msra.mxu0 0.0
  %1580 = vmatprep.subr.mxu0 0.0
  %1581 = vmatpush1.msra.mxu0 0.0
  %1582 = vmatprep.subr.mxu0 0.0
  %1583 = vmatpush1.msra.mxu0 0.0
  %1584 = vmatprep.subr.mxu0 0.0
  %1585 = vmatpush1.msra.mxu0 0.0
  %1586 = vmatprep.subr.mxu0 0.0
  %1587 = vmatpush1.msra.mxu0 0.0
  %1588 = vmatprep.subr.mxu0 0.0
  %1589 = vmatpush1.msra.mxu0 0.0
  %1590 = vmatprep.subr.mxu0 0.0
  %1591 = vmatpush1.msra.mxu0 0.0
  %1592 = vmatprep.subr.mxu0 0.0
  %1593 = vmatpush1.msra.mxu0 0.0
  %1594 = vmatprep.subr.mxu0 0.0
  %1595 = vmatpush1.msra.mxu0 0.0
  %1596 = vmatprep.subr.mxu0 0.0
  %1597 = vmatpush1.msra.mxu0 0.0
  %1598 = vmatprep.subr.mxu0 0.0
  %1599 = vmatpush1.msra.mxu0 0.0
  %1600 = vmatprep.subr.mxu0 0.0
  %1601 = vmatpush1.msra.mxu0 %v356
  %1602 = vmatprep.subr.mxu0 0.0
  %1603 = vmatpush2.msra.mxu0 0.0
  %1604 = vmatprep.subr.mxu0 0.0
  %1605 = vmatpush2.msra.mxu0 0.0
  %1606 = vmatprep.subr.mxu0 0.0
  %1607 = vmatpush2.msra.mxu0 0.0
  %1608 = vmatprep.subr.mxu0 0.0
  %1609 = vmatpush2.msra.mxu0 0.0
  %1610 = vmatprep.subr.mxu0 0.0
  %1611 = vmatpush2.msra.mxu0 0.0
  %1612 = vmatprep.subr.mxu0 0.0
  %1613 = vmatpush2.msra.mxu0 0.0
  %1614 = vmatprep.subr.mxu0 0.0
  %1615 = vmatpush2.msra.mxu0 0.0
  %1616 = vmatprep.subr.mxu0 0.0
  %1617 = vmatpush2.msra.mxu0 0.0
  %1618 = vmatprep.subr.mxu0 0.0
  %1619 = vmatpush2.msra.mxu0 0.0
  %1620 = vmatprep.subr.mxu0 0.0
  %1621 = vmatpush2.msra.mxu0 0.0
  %1622 = vmatprep.subr.mxu0 0.0
  %1623 = vmatpush2.msra.mxu0 0.0
  %1624 = vmatprep.subr.mxu0 0.0
  %1625 = vmatpush2.msra.mxu0 0.0
  %1626 = vmatprep.subr.mxu0 0.0
  %1627 = vmatpush2.msra.mxu0 0.0
  %1628 = vmatprep.subr.mxu0 0.0
  %1629 = vmatpush2.msra.mxu0 0.0
  %1630 = vmatprep.subr.mxu0 0.0
  %1631 = vmatpush2.msra.mxu0 0.0
  %1632 = vmatprep.subr.mxu0 0.0
  %1633 = vmatpush2.msra.mxu0 0.0
  %1634 = vmatprep.mubr.f32.mxu0 0.0
  %1635 = vmatmul.mubr.f32.gmra.mxu0 %v1568
  %v1636 = vpop.f32.mrf.mxu0
  %v1637 = vadd.f32 0.0, %v1636
  %v1638 = vpop.f32.mrf.mxu0
  %1639 = vdwg.mxu0
  %v1641 = vsel %vm851, %v1566, 0
  %1643 = vmatprep.subr.mxu0 0.0
  %1644 = vmatpush1.msra.mxu0 0.0
  %1645 = vmatprep.subr.mxu0 0.0
  %1646 = vmatpush1.msra.mxu0 0.0
  %1647 = vmatprep.subr.mxu0 0.0
  %1648 = vmatpush1.msra.mxu0 0.0
  %1649 = vmatprep.subr.mxu0 0.0
  %1650 = vmatpush1.msra.mxu0 0.0
  %1651 = vmatprep.subr.mxu0 0.0
  %1652 = vmatpush1.msra.mxu0 0.0
  %1653 = vmatprep.subr.mxu0 0.0
  %1654 = vmatpush1.msra.mxu0 0.0
  %1655 = vmatprep.subr.mxu0 0.0
  %1656 = vmatpush1.msra.mxu0 0.0
  %1657 = vmatprep.subr.mxu0 0.0
  %1658 = vmatpush1.msra.mxu0 0.0
  %1659 = vmatprep.subr.mxu0 0.0
  %1660 = vmatpush1.msra.mxu0 0.0
  %1661 = vmatprep.subr.mxu0 0.0
  %1662 = vmatpush1.msra.mxu0 0.0
  %1663 = vmatprep.subr.mxu0 0.0
  %1664 = vmatpush1.msra.mxu0 0.0
  %1665 = vmatprep.subr.mxu0 0.0
  %1666 = vmatpush1.msra.mxu0 0.0
  %1667 = vmatprep.subr.mxu0 0.0
  %1668 = vmatpush1.msra.mxu0 0.0
  %1669 = vmatprep.subr.mxu0 0.0
  %1670 = vmatpush1.msra.mxu0 0.0
  %1671 = vmatprep.subr.mxu0 0.0
  %1672 = vmatpush1.msra.mxu0 0.0
  %1673 = vmatprep.subr.mxu0 0.0
  %1674 = vmatpush1.msra.mxu0 %v356
  %1675 = vmatprep.subr.mxu0 0.0
  %1676 = vmatpush2.msra.mxu0 0.0
  %1677 = vmatprep.subr.mxu0 0.0
  %1678 = vmatpush2.msra.mxu0 0.0
  %1679 = vmatprep.subr.mxu0 0.0
  %1680 = vmatpush2.msra.mxu0 0.0
  %1681 = vmatprep.subr.mxu0 0.0
  %1682 = vmatpush2.msra.mxu0 0.0
  %1683 = vmatprep.subr.mxu0 0.0
  %1684 = vmatpush2.msra.mxu0 0.0
  %1685 = vmatprep.subr.mxu0 0.0
  %1686 = vmatpush2.msra.mxu0 0.0
  %1687 = vmatprep.subr.mxu0 0.0
  %1688 = vmatpush2.msra.mxu0 0.0
  %1689 = vmatprep.subr.mxu0 0.0
  %1690 = vmatpush2.msra.mxu0 0.0
  %1691 = vmatprep.subr.mxu0 0.0
  %1692 = vmatpush2.msra.mxu0 0.0
  %1693 = vmatprep.subr.mxu0 0.0
  %1694 = vmatpush2.msra.mxu0 0.0
  %1695 = vmatprep.subr.mxu0 0.0
  %1696 = vmatpush2.msra.mxu0 0.0
  %1697 = vmatprep.subr.mxu0 0.0
  %1698 = vmatpush2.msra.mxu0 0.0
  %1699 = vmatprep.subr.mxu0 0.0
  %1700 = vmatpush2.msra.mxu0 0.0
  %1701 = vmatprep.subr.mxu0 0.0
  %1702 = vmatpush2.msra.mxu0 0.0
  %1703 = vmatprep.subr.mxu0 0.0
  %1704 = vmatpush2.msra.mxu0 0.0
  %1705 = vmatprep.subr.mxu0 0.0
  %1706 = vmatpush2.msra.mxu0 0.0
  %1707 = vmatprep.mubr.f32.mxu0 0.0
  %1708 = vmatmul.mubr.f32.gmra.mxu0 %v1641
  %v1709 = vpop.f32.mrf.mxu0
  %v1710 = vadd.f32 0.0, %v1709
  %v1711 = vpop.f32.mrf.mxu0
  %1712 = vdwg.mxu0
  %v1713 = vlaneseq
  %v1714 = vshrl.u32 %v1713, 7
  %v1715 = vsub.s32 0, %v1714
  %v1716 = vrot.slane %v1637, %v1715
  %v1717 = vmul.f32 %v1389, %v1716
  %v1718 = vmul.f32 %v1390, %v1716
  %v1719 = vmul.f32 %v1391, %v1716
  %v1720 = vmul.f32 %v1392, %v1716
  %v1721 = vlaneseq
  %v1722 = vshrl.u32 %v1721, 7
  %v1723 = vsub.s32 0, %v1722
  %v1724 = vrot.slane %v1710, %v1723
  %v1725 = vadd.f32 %v1717, %v1724
  %v1726 = vadd.f32 %v1718, %v1724
  %v1727 = vadd.f32 %v1719, %v1724
  %v1728 = vadd.f32 %v1720, %v1724
  %v1729 = vmax.f32 %v1725, 0.0
  %v1730 = vmax.f32 %v1726, 0.0
  %v1731 = vmax.f32 %v1727, 0.0
  %v1732 = vmax.f32 %v1728, 0.0
  %1733 = vst [vmem:[%s7] sm:$0xff] %v1729
  %1734 = vst [vmem:[%s7 + $0x8] sm:$0xff] %v1730
  %1735 = vst [vmem:[%s7 + $0x10] sm:$0xff] %v1731
  %1736 = vst [vmem:[%s7 + $0x18] sm:$0xff] %v1732
  // Predicated region
  $region30: #{double_conv_forward.1} parent=0 // pred_check
    _
  $region31: #{double_conv_forward.1} parent=0 // pred_check_branch
    %1738 = sbr.rel (0) target = $region33
  $region32: #{double_conv_forward.1} parent=0 // pred_region
    _
  $region33: #{double_conv_forward.1} parent=0 // pred_fallthru
    _
  // Predicated region
  $region34: #{double_conv_forward.1} parent=0 // pred_check
    _
  $region35: #{double_conv_forward.1} parent=0 // pred_check_branch
    %1740 = sbr.rel (0) target = $region37
  $region36: #{double_conv_forward.1} parent=0 // pred_region
    _
  $region37: #{double_conv_forward.1} parent=0 // pred_fallthru
    _

</llo_original>
